<compile_context>
chip_gen: v7x
topology: tpu7x:2x2x1
jax: 0.10.0
libtpu: 0.0.40
codegen_flags: <defaults>
</compile_context>

<pallas_src>
import jax
import jax.numpy as jnp
from jax import lax
from jax.experimental import pallas as pl
from jax.experimental.pallas import tpu as pltpu

GROUP = 4  # SortAttn default group


# ----------------------------- Pallas kernel ------------------------------ #
def _fss_gru_cell_kernel(
    x_ref, h_ref,
    wi_ref, wh_ref,              # fused GRU weights, transposed: (I, 3H), (H, 3H)
    brz_ref, bin_ref, bhn_ref,   # biases: (1, 2H) [r|z pre-summed], (1, H), (1, H)
    atop_ref, abot_ref, w4_ref,  # fused attention matrices: (H,2H), (H,2H), (2H,H)
    out_ref,
):
    f32 = jnp.float32
    x = x_ref[...]                               # (TB, I)
    h = h_ref[...]                               # (TB, H)
    TB, H = h.shape

    def mm(a, b):
        return jnp.dot(a, b, preferred_element_type=f32)

    # ---------- nn.GRUCell: two wide MXU matmuls, gates [r|z|n] on lanes -----
    gi = mm(x, wi_ref[...])                      # (TB, 3H)
    gh = mm(h, wh_ref[...])                      # (TB, 3H)
    rz = jax.nn.sigmoid(gi[:, :2 * H] + gh[:, :2 * H] + brz_ref[...])
    r, z = rz[:, :H], rz[:, H:]
    n = jnp.tanh(gi[:, 2 * H:] + bin_ref[...] + r * (gh[:, 2 * H:] + bhn_ref[...]))
    nh = (1.0 - z) * n + z * h                   # new hidden, (TB, H)

    # ---------- torch.sort(nh, dim=1, stable=True).values (ascending) --------
    # prec[b, j, i] = 1.0 iff element j strictly precedes element i in the
    # stable ascending order.  j lives on the SUBLANE axis so both reductions
    # below are sublane-direction (no cross-lane XLU reduce).
    # NOTE: exact for finite values; NaNs in nh would break the ranking.
    jj = lax.broadcasted_iota(jnp.int32, (H, H), 0)      # index along cube axis 1
    kk = lax.broadcasted_iota(jnp.int32, (H, H), 1)      # index along cube axis 2
    v_j = nh[:, :, None]                                  # (TB, H, 1)
    v_i = nh[:, None, :]                                  # (TB, 1, H)
    prec = jnp.where((v_j < v_i) | ((v_j == v_i) & (jj < kk)[None]), 1.0, 0.0)
    rank = jnp.sum(prec, axis=1).astype(jnp.int32)        # (TB, H): exact 0..H-1
    # one-hot select: weighted[b, i, k] = nh[b, i] iff rank[b, i] == k
    weighted = jnp.where(rank[:, :, None] == kk[None], nh[:, :, None], 0.0)
    sorted_nh = jnp.sum(weighted, axis=1)                 # (TB, H)

    # ---------- SortAttn MLP, linear chain pre-fused into A = [A_top; A_bot] --
    v = mm(nh, atop_ref[...]) + mm(sorted_nh, abot_ref[...])   # (TB, 2H)
    v = jnp.maximum(v, 0.0)                                     # ReLU
    scores = jax.nn.sigmoid(mm(v, w4_ref[...]))                 # (TB, H)
    out_ref[...] = nh * scores


# ----------------------------- JAX glue ----------------------------------- #
def _block_diag(*blocks):
    rows = sum(b.shape[0] for b in blocks)
    cols = sum(b.shape[1] for b in blocks)
    out = jnp.zeros((rows, cols), blocks[0].dtype)
    r = c = 0
    for b in blocks:
        out = out.at[r:r + b.shape[0], c:c + b.shape[1]].set(b)
        r += b.shape[0]
        c += b.shape[1]
    return out


def _shuffle_perm_matrix(group, group_hidden, dtype=jnp.float32):
    # out_flat[p] = in_flat[(p % group) * group_hidden + p // group]
    n = group * group_hidden
    dst = jnp.arange(n)
    src = (dst % group) * group_hidden + dst // group
    return jnp.zeros((n, n), dtype).at[src, dst].set(1.0)


def _hp(a, b):
    # full-f32 precision for the host-side weight pre-fusion
    return jnp.dot(a, b, precision=jax.lax.Precision.HIGHEST)


def init_params(key, input_size, hidden_size, group=GROUP):
    H = hidden_size
    gh = 2 * H // group
    ks = jax.random.split(key, 8)
    u = lambda k, shape, s: jax.random.uniform(k, shape, jnp.float32, -s, s)
    s_gru = 1.0 / (H ** 0.5)
    return dict(
        W_ih=u(ks[0], (3 * H, input_size), s_gru),
        W_hh=u(ks[1], (3 * H, H), s_gru),
        b_ih=u(ks[2], (3 * H,), s_gru),
        b_hh=u(ks[3], (3 * H,), s_gru),
        W1=u(ks[4], (H, H), 1.0 / (H ** 0.5)),
        W2=u(ks[5], (gh, gh), 1.0 / (gh ** 0.5)),
        W3=u(ks[6], (gh, gh), 1.0 / (gh ** 0.5)),
        W4=u(ks[7], (H, 2 * H), 1.0 / ((2 * H) ** 0.5)),
    )


def fss_gru_cell(x, h, params, group=GROUP, block_batch=8):
    B, H = h.shape
    I = x.shape[1]
    gh = 2 * H // group

    # ---- fused GRU weights / biases (gate order r|z|n on the lane axis) ----
    w_i = params["W_ih"].T                               # (I, 3H)
    w_h = params["W_hh"].T                               # (H, 3H)
    b_ih, b_hh = params["b_ih"], params["b_hh"]
    brz = (b_ih[:2 * H] + b_hh[:2 * H])[None]            # (1, 2H)
    b_in = b_ih[2 * H:][None]                            # (1, H)
    b_hn = b_hh[2 * H:][None]                            # (1, H)

    # ---- fold the whole linear attention chain into one (2H, 2H) matrix ----
    W1T = params["W1"].T
    a1 = _block_diag(W1T, W1T)                           # Linear(H,H) per stack row
    a2 = _block_diag(*([params["W2"].T] * group))        # grouped Linear(gh,gh)
    a3 = _block_diag(*([params["W3"].T] * group))        # grouped Linear(gh,gh)
    perm = _shuffle_perm_matrix(group, gh)               # Shuffle permutation
    A = _hp(_hp(_hp(_hp(a1, perm), a2), perm), a3)       # (2H, 2H)
    a_top, a_bot = A[:H], A[H:]                          # rows hit nh / sorted_nh
    w4_t = params["W4"].T                                # (2H, H)

    # ---- batch tiling.  TODO(synk): size TB per generation (64 MiB VMEM on
    # v7x) — the (TB,H,H) sort cubes are the dominant VMEM consumer at large H.
    TB = block_batch if (B % block_batch == 0) else B
    grid = (B // TB,)

    def _tiled(cols):
        return pl.BlockSpec((TB, cols), lambda i: (i, 0))

    def _resident(shape):
        # full-array block, constant index_map -> stays VMEM-resident across grid
        return pl.BlockSpec(shape, lambda i, _n=len(shape): (0,) * _n)

    args = (x, h, w_i, w_h, brz, b_in, b_hn, a_top, a_bot, w4_t)
    in_specs = [
        _tiled(I), _tiled(H),
        _resident(w_i.shape), _resident(w_h.shape),
        _resident(brz.shape), _resident(b_in.shape), _resident(b_hn.shape),
        _resident(a_top.shape), _resident(a_bot.shape), _resident(w4_t.shape),
    ]

    return pl.pallas_call(
        _fss_gru_cell_kernel,
        out_shape=jax.ShapeDtypeStruct((B, H), jnp.float32),
        grid=grid,
        in_specs=in_specs,
        out_specs=_tiled(H),
        compiler_params=pltpu.CompilerParams(
            dimension_semantics=("parallel",),        # megacore on v7x
            vmem_limit_bytes=32 * 1024 * 1024,
        ),
    )(*args)


# --------------------------- pure-JAX reference ---------------------------- #
def reference_forward(x, h, params, group=GROUP):
    B, H = h.shape
    gh = 2 * H // group
    gates_i = x @ params["W_ih"].T + params["b_ih"]
    gates_h = h @ params["W_hh"].T + params["b_hh"]
    r = jax.nn.sigmoid(gates_i[:, :H] + gates_h[:, :H])
    z = jax.nn.sigmoid(gates_i[:, H:2 * H] + gates_h[:, H:2 * H])
    n = jnp.tanh(gates_i[:, 2 * H:] + r * gates_h[:, 2 * H:])
    nh = (1.0 - z) * n + z * h

    sorted_nh = jnp.sort(nh, axis=1)
    se = jnp.stack([nh, sorted_nh], axis=1)                  # (B, 2, H)
    y = se @ params["W1"].T                                  # (B, 2, H)
    y = y.reshape(B, group, gh)                              # Flatten + Unflatten
    y = jnp.transpose(y, (0, 2, 1)).reshape(B, group, gh)    # Shuffle
    y = y @ params["W2"].T
    y = jnp.transpose(y, (0, 2, 1)).reshape(B, group, gh)    # Shuffle
    y = y @ params["W3"].T
    y = jax.nn.relu(y)
    y = y.reshape(B, group * gh)
    scores = jax.nn.sigmoid(y @ params["W4"].T)
    return nh * scores


if __name__ == "__main__":
    B, INPUT, HIDDEN = 16, 16, 32
    key = jax.random.PRNGKey(0)
    kx, kh, kp = jax.random.split(key, 3)
    x = jax.random.normal(kx, (B, INPUT), jnp.float32)
    hidden = jax.random.normal(kh, (B, HIDDEN), jnp.float32)
    params = init_params(kp, INPUT, HIDDEN)

    out = jax.block_until_ready(fss_gru_cell(x, hidden, params))
    ref = reference_forward(x, hidden, params)

    assert out.shape == (B, HIDDEN)
    # Tolerance note: the kernel applies the pre-fused attention matrix A
    # (mathematically identical to the stepwise chain); on TPU, default f32
    # matmuls may run as bf16 MXU passes, so the differently-associated fused
    # path can differ from the stepwise XLA reference at the ~1e-3 level.
    assert jnp.allclose(out, ref, atol=5e-3, rtol=5e-3), (
        float(jnp.max(jnp.abs(out - ref))))
    print("KERNEL_OK")
</pallas_src>

<mosaic_0001>
module attributes {stable_mosaic.version = 11 : i64} {
  func.func @_fss_gru_cell_kernel(%arg0: i32, %arg1: memref<8x16xf32, #tpu.memory_space<vmem>>, %arg2: memref<8x32xf32, #tpu.memory_space<vmem>>, %arg3: memref<16x96xf32, #tpu.memory_space<vmem>>, %arg4: memref<32x96xf32, #tpu.memory_space<vmem>>, %arg5: memref<1x64xf32, #tpu.memory_space<vmem>>, %arg6: memref<1x32xf32, #tpu.memory_space<vmem>>, %arg7: memref<1x32xf32, #tpu.memory_space<vmem>>, %arg8: memref<32x64xf32, #tpu.memory_space<vmem>>, %arg9: memref<32x64xf32, #tpu.memory_space<vmem>>, %arg10: memref<64x32xf32, #tpu.memory_space<vmem>>, %arg11: memref<8x32xf32, #tpu.memory_space<vmem>>) attributes {dimension_semantics = [#tpu.dimension_semantics<parallel>], iteration_bounds = array<i64: 2>, scalar_prefetch = 0 : i64, scratch_operands = 0 : i64, tpu.core_type = #tpu.core_type<tc>, window_params = [{transform_indices = @transform_0, window_bounds = array<i64: 8, 16>}, {transform_indices = @transform_1, window_bounds = array<i64: 8, 32>}, {pipeline_mode = #tpu.pipeline_mode<synchronous>, transform_indices = @transform_2, window_bounds = array<i64: 16, 96>}, {pipeline_mode = #tpu.pipeline_mode<synchronous>, transform_indices = @transform_3, window_bounds = array<i64: 32, 96>}, {pipeline_mode = #tpu.pipeline_mode<synchronous>, transform_indices = @transform_4, window_bounds = array<i64: 1, 64>}, {pipeline_mode = #tpu.pipeline_mode<synchronous>, transform_indices = @transform_5, window_bounds = array<i64: 1, 32>}, {pipeline_mode = #tpu.pipeline_mode<synchronous>, transform_indices = @transform_6, window_bounds = array<i64: 1, 32>}, {pipeline_mode = #tpu.pipeline_mode<synchronous>, transform_indices = @transform_7, window_bounds = array<i64: 32, 64>}, {pipeline_mode = #tpu.pipeline_mode<synchronous>, transform_indices = @transform_8, window_bounds = array<i64: 32, 64>}, {pipeline_mode = #tpu.pipeline_mode<synchronous>, transform_indices = @transform_9, window_bounds = array<i64: 64, 32>}, {transform_indices = @transform_10, window_bounds = array<i64: 8, 32>}]} {
    %c0 = arith.constant 0 : index
    %c0_0 = arith.constant 0 : index
    %0 = vector.load %arg1[%c0, %c0_0] : memref<8x16xf32, #tpu.memory_space<vmem>>, vector<8x16xf32>
    %c0_1 = arith.constant 0 : index
    %c0_2 = arith.constant 0 : index
    %1 = vector.load %arg2[%c0_1, %c0_2] : memref<8x32xf32, #tpu.memory_space<vmem>>, vector<8x32xf32>
    %c0_3 = arith.constant 0 : index
    %c0_4 = arith.constant 0 : index
    %2 = vector.load %arg3[%c0_3, %c0_4] : memref<16x96xf32, #tpu.memory_space<vmem>>, vector<16x96xf32>
    %cst = arith.constant dense<0.000000e+00> : vector<8x96xf32>
    %3 = tpu.matmul %0, %2, %cst {dimension_numbers = #tpu.dot_dimension_numbers<[1], [0], [0], [1], [0, 0, 1, 1], [], []>} : vector<8x16xf32>, vector<16x96xf32>, vector<8x96xf32> -> vector<8x96xf32>
    %c0_5 = arith.constant 0 : index
    %c0_6 = arith.constant 0 : index
    %4 = vector.load %arg4[%c0_5, %c0_6] : memref<32x96xf32, #tpu.memory_space<vmem>>, vector<32x96xf32>
    %cst_7 = arith.constant dense<0.000000e+00> : vector<8x96xf32>
    %5 = tpu.matmul %1, %4, %cst_7 {dimension_numbers = #tpu.dot_dimension_numbers<[1], [0], [0], [1], [0, 0, 1, 1], [], []>} : vector<8x32xf32>, vector<32x96xf32>, vector<8x96xf32> -> vector<8x96xf32>
    %6 = vector.extract_strided_slice %3 {offsets = [0, 0], sizes = [8, 64], strides = [1, 1]} : vector<8x96xf32> to vector<8x64xf32>
    %7 = vector.extract_strided_slice %5 {offsets = [0, 0], sizes = [8, 64], strides = [1, 1]} : vector<8x96xf32> to vector<8x64xf32>
    %8 = arith.addf %6, %7 : vector<8x64xf32>
    %c0_8 = arith.constant 0 : index
    %c0_9 = arith.constant 0 : index
    %9 = vector.load %arg5[%c0_8, %c0_9] : memref<1x64xf32, #tpu.memory_space<vmem>>, vector<1x64xf32>
    %10 = vector.broadcast %9 : vector<1x64xf32> to vector<8x64xf32>
    %11 = arith.addf %8, %10 : vector<8x64xf32>
    %12 = arith.negf %11 : vector<8x64xf32>
    %13 = math.exp %12 : vector<8x64xf32>
    %cst_10 = arith.constant 1.000000e+00 : f32
    %14 = vector.broadcast %cst_10 : f32 to vector<8x64xf32>
    %15 = arith.addf %14, %13 : vector<8x64xf32>
    %16 = arith.divf %14, %15 : vector<8x64xf32>
    %17 = vector.extract_strided_slice %16 {offsets = [0, 0], sizes = [8, 32], strides = [1, 1]} : vector<8x64xf32> to vector<8x32xf32>
    %18 = vector.extract_strided_slice %16 {offsets = [0, 32], sizes = [8, 32], strides = [1, 1]} : vector<8x64xf32> to vector<8x32xf32>
    %19 = vector.extract_strided_slice %3 {offsets = [0, 64], sizes = [8, 32], strides = [1, 1]} : vector<8x96xf32> to vector<8x32xf32>
    %c0_11 = arith.constant 0 : index
    %c0_12 = arith.constant 0 : index
    %20 = vector.load %arg6[%c0_11, %c0_12] : memref<1x32xf32, #tpu.memory_space<vmem>>, vector<1x32xf32>
    %21 = vector.broadcast %20 : vector<1x32xf32> to vector<8x32xf32>
    %22 = arith.addf %19, %21 : vector<8x32xf32>
    %23 = vector.extract_strided_slice %5 {offsets = [0, 64], sizes = [8, 32], strides = [1, 1]} : vector<8x96xf32> to vector<8x32xf32>
    %c0_13 = arith.constant 0 : index
    %c0_14 = arith.constant 0 : index
    %24 = vector.load %arg7[%c0_13, %c0_14] : memref<1x32xf32, #tpu.memory_space<vmem>>, vector<1x32xf32>
    %25 = vector.broadcast %24 : vector<1x32xf32> to vector<8x32xf32>
    %26 = arith.addf %23, %25 : vector<8x32xf32>
    %27 = arith.mulf %17, %26 : vector<8x32xf32>
    %28 = arith.addf %22, %27 : vector<8x32xf32>
    %29 = math.tanh %28 : vector<8x32xf32>
    %cst_15 = arith.constant 1.000000e+00 : f32
    %30 = vector.broadcast %cst_15 : f32 to vector<8x32xf32>
    %31 = arith.subf %30, %18 : vector<8x32xf32>
    %32 = arith.mulf %31, %29 : vector<8x32xf32>
    %33 = arith.mulf %18, %1 : vector<8x32xf32>
    %34 = arith.addf %32, %33 : vector<8x32xf32>
    %35 = tpu.iota {dimensions = array<i32: 0>} : vector<32x32xi32>
    %36 = tpu.iota {dimensions = array<i32: 1>} : vector<32x32xi32>
    %37 = vector.shape_cast %34 : vector<8x32xf32> to vector<8x32x1xf32>
    %38 = vector.shape_cast %34 : vector<8x32xf32> to vector<8x1x32xf32>
    %39 = vector.broadcast %37 : vector<8x32x1xf32> to vector<8x32x32xf32>
    %40 = vector.broadcast %38 : vector<8x1x32xf32> to vector<8x32x32xf32>
    %41 = arith.cmpf olt, %39, %40 : vector<8x32x32xf32>
    %42 = vector.broadcast %37 : vector<8x32x1xf32> to vector<8x32x32xf32>
    %43 = vector.broadcast %38 : vector<8x1x32xf32> to vector<8x32x32xf32>
    %44 = arith.cmpf oeq, %42, %43 : vector<8x32x32xf32>
    %45 = arith.cmpi slt, %35, %36 : vector<32x32xi32>
    %46 = vector.shape_cast %45 : vector<32x32xi1> to vector<1x32x32xi1>
    %47 = vector.broadcast %46 : vector<1x32x32xi1> to vector<8x32x32xi1>
    %48 = arith.andi %44, %47 : vector<8x32x32xi1>
    %49 = arith.ori %41, %48 : vector<8x32x32xi1>
    %cst_16 = arith.constant 1.000000e+00 : f32
    %cst_17 = arith.constant 0.000000e+00 : f32
    %50 = vector.broadcast %cst_16 : f32 to vector<8x32x32xf32>
    %51 = vector.broadcast %cst_17 : f32 to vector<8x32x32xf32>
    %52 = arith.select %49, %50, %51 : vector<8x32x32xi1>, vector<8x32x32xf32>
    %cst_18 = arith.constant dense<0.000000e+00> : vector<8x32xf32>
    %53 = vector.multi_reduction <add>, %52, %cst_18 [1] : vector<8x32x32xf32> to vector<8x32xf32>
    %54 = arith.fptosi %53 : vector<8x32xf32> to vector<8x32xi32>
    %55 = vector.shape_cast %54 : vector<8x32xi32> to vector<8x32x1xi32>
    %56 = vector.shape_cast %36 : vector<32x32xi32> to vector<1x32x32xi32>
    %57 = vector.broadcast %55 : vector<8x32x1xi32> to vector<8x32x32xi32>
    %58 = vector.broadcast %56 : vector<1x32x32xi32> to vector<8x32x32xi32>
    %59 = arith.cmpi eq, %57, %58 : vector<8x32x32xi32>
    %60 = vector.shape_cast %34 : vector<8x32xf32> to vector<8x32x1xf32>
    %cst_19 = arith.constant 0.000000e+00 : f32
    %61 = vector.shape_cast %60 : vector<8x32x1xf32> to vector<8x32x1xf32>
    %62 = vector.broadcast %61 : vector<8x32x1xf32> to vector<8x32x32xf32>
    %63 = vector.broadcast %cst_19 : f32 to vector<8x32x32xf32>
    %64 = arith.select %59, %62, %63 : vector<8x32x32xi1>, vector<8x32x32xf32>
    %cst_20 = arith.constant dense<0.000000e+00> : vector<8x32xf32>
    %65 = vector.multi_reduction <add>, %64, %cst_20 [1] : vector<8x32x32xf32> to vector<8x32xf32>
    %c0_21 = arith.constant 0 : index
    %c0_22 = arith.constant 0 : index
    %66 = vector.load %arg8[%c0_21, %c0_22] : memref<32x64xf32, #tpu.memory_space<vmem>>, vector<32x64xf32>
    %cst_23 = arith.constant dense<0.000000e+00> : vector<8x64xf32>
    %67 = tpu.matmul %34, %66, %cst_23 {dimension_numbers = #tpu.dot_dimension_numbers<[1], [0], [0], [1], [0, 0, 1, 1], [], []>} : vector<8x32xf32>, vector<32x64xf32>, vector<8x64xf32> -> vector<8x64xf32>
    %c0_24 = arith.constant 0 : index
    %c0_25 = arith.constant 0 : index
    %68 = vector.load %arg9[%c0_24, %c0_25] : memref<32x64xf32, #tpu.memory_space<vmem>>, vector<32x64xf32>
    %cst_26 = arith.constant dense<0.000000e+00> : vector<8x64xf32>
    %69 = tpu.matmul %65, %68, %cst_26 {dimension_numbers = #tpu.dot_dimension_numbers<[1], [0], [0], [1], [0, 0, 1, 1], [], []>} : vector<8x32xf32>, vector<32x64xf32>, vector<8x64xf32> -> vector<8x64xf32>
    %70 = arith.addf %67, %69 : vector<8x64xf32>
    %cst_27 = arith.constant 0.000000e+00 : f32
    %71 = vector.broadcast %cst_27 : f32 to vector<8x64xf32>
    %72 = arith.maximumf %70, %71 : vector<8x64xf32>
    %c0_28 = arith.constant 0 : index
    %c0_29 = arith.constant 0 : index
    %73 = vector.load %arg10[%c0_28, %c0_29] : memref<64x32xf32, #tpu.memory_space<vmem>>, vector<64x32xf32>
    %cst_30 = arith.constant dense<0.000000e+00> : vector<8x32xf32>
    %74 = tpu.matmul %72, %73, %cst_30 {dimension_numbers = #tpu.dot_dimension_numbers<[1], [0], [0], [1], [0, 0, 1, 1], [], []>} : vector<8x64xf32>, vector<64x32xf32>, vector<8x32xf32> -> vector<8x32xf32>
    %75 = arith.negf %74 : vector<8x32xf32>
    %76 = math.exp %75 : vector<8x32xf32>
    %cst_31 = arith.constant 1.000000e+00 : f32
    %77 = vector.broadcast %cst_31 : f32 to vector<8x32xf32>
    %78 = arith.addf %77, %76 : vector<8x32xf32>
    %79 = arith.divf %77, %78 : vector<8x32xf32>
    %80 = arith.mulf %34, %79 : vector<8x32xf32>
    %c0_32 = arith.constant 0 : index
    %c0_33 = arith.constant 0 : index
    %81 = vector.load %arg11[%c0_32, %c0_33] : memref<8x32xf32, #tpu.memory_space<vmem>>, vector<8x32xf32>
    tpu.vector_store %arg11[%c0_32, %c0_33], %80 {strides = array<i32>} : memref<8x32xf32, #tpu.memory_space<vmem>>, vector<8x32xf32>,
    return
  }
  func.func @transform_0(%arg0: i32) -> (i32, i32) {
    %c0_i32 = arith.constant 0 : i32
    %c0_i32_0 = arith.constant 0 : i32
    return %arg0, %c0_i32 : i32, i32
  }
  func.func @transform_1(%arg0: i32) -> (i32, i32) {
    %c0_i32 = arith.constant 0 : i32
    %c0_i32_0 = arith.constant 0 : i32
    return %arg0, %c0_i32 : i32, i32
  }
  func.func @transform_2(%arg0: i32) -> (i32, i32) {
    %c0_i32 = arith.constant 0 : i32
    %c0_i32_0 = arith.constant 0 : i32
    %c0_i32_1 = arith.constant 0 : i32
    return %c0_i32, %c0_i32_0 : i32, i32
  }
  func.func @transform_3(%arg0: i32) -> (i32, i32) {
    %c0_i32 = arith.constant 0 : i32
    %c0_i32_0 = arith.constant 0 : i32
    %c0_i32_1 = arith.constant 0 : i32
    return %c0_i32, %c0_i32_0 : i32, i32
  }
  func.func @transform_4(%arg0: i32) -> (i32, i32) {
    %c0_i32 = arith.constant 0 : i32
    %c0_i32_0 = arith.constant 0 : i32
    %c0_i32_1 = arith.constant 0 : i32
    return %c0_i32, %c0_i32_0 : i32, i32
  }
  func.func @transform_5(%arg0: i32) -> (i32, i32) {
    %c0_i32 = arith.constant 0 : i32
    %c0_i32_0 = arith.constant 0 : i32
    %c0_i32_1 = arith.constant 0 : i32
    return %c0_i32, %c0_i32_0 : i32, i32
  }
  func.func @transform_6(%arg0: i32) -> (i32, i32) {
    %c0_i32 = arith.constant 0 : i32
    %c0_i32_0 = arith.constant 0 : i32
    %c0_i32_1 = arith.constant 0 : i32
    return %c0_i32, %c0_i32_0 : i32, i32
  }
  func.func @transform_7(%arg0: i32) -> (i32, i32) {
    %c0_i32 = arith.constant 0 : i32
    %c0_i32_0 = arith.constant 0 : i32
    %c0_i32_1 = arith.constant 0 : i32
    return %c0_i32, %c0_i32_0 : i32, i32
  }
  func.func @transform_8(%arg0: i32) -> (i32, i32) {
    %c0_i32 = arith.constant 0 : i32
    %c0_i32_0 = arith.constant 0 : i32
    %c0_i32_1 = arith.constant 0 : i32
    return %c0_i32, %c0_i32_0 : i32, i32
  }
  func.func @transform_9(%arg0: i32) -> (i32, i32) {
    %c0_i32 = arith.constant 0 : i32
    %c0_i32_0 = arith.constant 0 : i32
    %c0_i32_1 = arith.constant 0 : i32
    return %c0_i32, %c0_i32_0 : i32, i32
  }
  func.func @transform_10(%arg0: i32) -> (i32, i32) {
    %c0_i32 = arith.constant 0 : i32
    %c0_i32_0 = arith.constant 0 : i32
    return %arg0, %c0_i32 : i32, i32
  }
}

</mosaic_0001>

<llo_original>
// kernel: tpu_custom_call.1
$region0: #{tpu_custom_call.1}
  #allocation0 [shape = 'u32[]', space=smem, size = 0x4, offset = 0x4, fixed_abs, tag = 'smem constant byte address 0x4 - core index']
  #allocation1 [shape = 'u32[144,128]{1,0:T(1,128)}', space=vmem, size = 0x12000, scoped, tag = 'internal scratch']
  %s0 = inlined_call_operand.hbm [shape: f32[16,16], index: 0, kind: input, shape index: {}]
  %s1 = inlined_call_operand.hbm [shape: f32[16,32], index: 1, kind: input, shape index: {}]
  %s2 = inlined_call_operand.hbm [shape: f32[16,96], index: 2, kind: input, shape index: {}]
  %s3 = inlined_call_operand.vmem [shape: f32[32,96], index: 3, kind: input, shape index: {}]
  %s4 = inlined_call_operand.vmem [shape: f32[1,64], index: 4, kind: input, shape index: {}]
  %s5 = inlined_call_operand.vmem [shape: f32[1,32], index: 5, kind: input, shape index: {}]
  %s6 = inlined_call_operand.hbm [shape: f32[1,32], index: 6, kind: input, shape index: {}]
  %s7 = inlined_call_operand.vmem [shape: f32[32,64], index: 7, kind: input, shape index: {}]
  %s8 = inlined_call_operand.vmem [shape: f32[32,64], index: 8, kind: input, shape index: {}]
  %s9 = inlined_call_operand.vmem [shape: f32[64,32], index: 9, kind: input, shape index: {}]
  %s10 = inlined_call_operand.hbm [shape: f32[16,32], index: 10, kind: output, shape index: {}]
  %s11 = sld [smem:[#allocation0]]
  $region89: #{tpu_custom_call.1} parent=0
    _
  %s13 = ssub.s32 1, %s11
  %s14 = scalar_select 0, %s13, %s11
  $region1: #{tpu_custom_call.1} parent=0
    #allocation2 [shape = 'u8[8192]{0}', space=vmem, size = 0x2000, scoped, tag = 'input window, operand 0']
    #allocation3 [shape = 's32[2]{0}', space=sflag, size = 0x8, scoped, tag = 'scoped memory for tpu_custom_call.1']
    #allocation4 [shape = 's32[2]{0}', space=sflag, size = 0x8, scoped, tag = 'scoped memory for tpu_custom_call.1']
    #allocation5 [shape = 'u8[8192]{0}', space=vmem, size = 0x2000, scoped, tag = 'input window, operand 1']
    #allocation6 [shape = 's32[2]{0}', space=sflag, size = 0x8, scoped, tag = 'scoped memory for tpu_custom_call.1']
    #allocation7 [shape = 'u8[8192]{0}', space=vmem, size = 0x2000, scoped, tag = 'input window, operand 2, single buffered']
    #allocation8 [shape = 'u8[512]{0}', space=vmem, size = 0x400, scoped, tag = 'input window, operand 6, single buffered']
    #allocation9 [shape = 's32[1]{0}', space=sflag, size = 0x4, scoped, tag = 'scoped memory for tpu_custom_call.1']
    #allocation10 [shape = 'u8[8192]{0}', space=vmem, size = 0x2000, scoped, tag = 'output window, operand 0']
    %15 = vsyncpa [#allocation3], 0
    %s16 = scalar_lea.sflag [#allocation3], 1
    %17 = vsyncpa %s16, 0
    %18 = vsyncpa [#allocation6], 0
    %s19 = scalar_lea.sflag [#allocation6], 1
    %20 = vsyncpa %s19, 0
    %21 = vsyncpa [#allocation9], 0
    %22 = vsyncpa [#allocation4], 0
    %s23 = scalar_lea.sflag [#allocation4], 1
    %24 = vsyncpa %s23, 0
    loop: start=0, step=1, limit=4
    $region2: #{tpu_custom_call.1} parent=1 // loop_pre_header
      _
    $region3: #{tpu_custom_call.1} parent=1 // loop_header
      %s26 = sphi 0, %s30
      %p27 = scmp.ge.s32.totalorder %s26, 4
      %s36 = sphi 0, %s38
      %s39 = sphi 0, %s36
      %s40 = sphi 0, %s39
      %s56 = sphi 0, %s40
      %s62 = sphi 0, %s64
      %s65 = sphi 0, %s62
      %s66 = sphi 0, %s65
      %s82 = sphi 0, %s66
      %s86 = sphi 0, %s86
      %s88 = sphi 0, %s86
      %s89 = sphi 0, %s88
      %s103 = sphi 0, %s89
      %s107 = sphi 0, %s107
      %s109 = sphi 0, %s107
      %s110 = sphi 0, %s109
      %s124 = sphi 0, %s110
      %s128 = sphi 0, %s128
      %s130 = sphi 0, %s128
      %s131 = sphi 0, %s130
      %s145 = sphi 0, %s131
      %s149 = sphi 0, %s149
      %s151 = sphi 0, %s149
      %s152 = sphi 0, %s151
      %s166 = sphi 0, %s152
      %s170 = sphi 0, %s170
      %s172 = sphi 0, %s170
      %s173 = sphi 0, %s172
      %s187 = sphi 0, %s173
      %s191 = sphi 0, %s191
      %s193 = sphi 0, %s191
      %s194 = sphi 0, %s193
      %s208 = sphi 0, %s194
      %s212 = sphi 0, %s212
      %s214 = sphi 0, %s212
      %s215 = sphi 0, %s214
      %s229 = sphi 0, %s215
      %s233 = sphi 0, %s233
      %s235 = sphi 0, %s233
      %s236 = sphi 0, %s235
      %s250 = sphi 0, %s236
      %s256 = sphi 0, %s258
      %s259 = sphi 0, %s256
      %s260 = sphi 0, %s259
      %s276 = sphi 0, %s260
    $region4: #{tpu_custom_call.1} parent=1 // loop_header_branch
      %29 = sbr.rel (%p27) target = $region8
    $region5: #{tpu_custom_call.1} parent=1 // loop_body
      %s31 = ssub.s32 %s26, 1
      %s32 = ssub.s32 %s26, 2
      %s33 = sadd.s32 %s26, 1
      %s34 = ssub.s32 %s26, %s33
      %p35 = scmp.eq.s32.totalorder %s34, 0
      %s37 = sadd.s32 %s36, 1
      %s38 = scalar_select %p35, %s36, %s37
      %p41 = pneg %p35
      %p42 = scmp.eq.s32.totalorder %s26, 1
      %p43 = por %p41, %p42
      %p44 = scmp.ne.s32.totalorder %s36, %s39
      %p45 = scmp.eq.s32.totalorder %s26, 0
      %p46 = por %p44, %p45
      %p47 = scmp.ne.s32.totalorder %s36, %s39
      %p48 = scmp.eq.s32.totalorder %s31, 1
      %p49 = por %p47, %p48
      %p50 = scmp.ne.s32.totalorder %s39, %s40
      %p51 = scmp.eq.s32.totalorder %s31, 0
      %p52 = por %p50, %p51
      %p53 = scmp.ne.s32.totalorder %s39, %s40
      %p54 = scmp.eq.s32.totalorder %s32, 1
      %p55 = por %p53, %p54
      %p57 = scmp.ne.s32.totalorder %s40, %s56
      %p58 = scmp.eq.s32.totalorder %s32, 0
      %p59 = por %p57, %p58
      %s60 = ssub.s32 %s26, %s33
      %p61 = scmp.eq.s32.totalorder %s60, 0
      %s63 = sadd.s32 %s62, 1
      %s64 = scalar_select %p61, %s62, %s63
      %p67 = pneg %p61
      %p68 = scmp.eq.s32.totalorder %s26, 1
      %p69 = por %p67, %p68
      %p70 = scmp.ne.s32.totalorder %s62, %s65
      %p71 = scmp.eq.s32.totalorder %s26, 0
      %p72 = por %p70, %p71
      %p73 = scmp.ne.s32.totalorder %s62, %s65
      %p74 = scmp.eq.s32.totalorder %s31, 1
      %p75 = por %p73, %p74
      %p76 = scmp.ne.s32.totalorder %s65, %s66
      %p77 = scmp.eq.s32.totalorder %s31, 0
      %p78 = por %p76, %p77
      %p79 = scmp.ne.s32.totalorder %s65, %s66
      %p80 = scmp.eq.s32.totalorder %s32, 1
      %p81 = por %p79, %p80
      %p83 = scmp.ne.s32.totalorder %s66, %s82
      %p84 = scmp.eq.s32.totalorder %s32, 0
      %p85 = por %p83, %p84
      %s87 = sadd.s32 %s86, 1
      %p90 = scmp.eq.s32.totalorder %s26, 1
      %p91 = scmp.ne.s32.totalorder %s86, %s88
      %p92 = scmp.eq.s32.totalorder %s26, 0
      %p93 = por %p91, %p92
      %p94 = scmp.ne.s32.totalorder %s86, %s88
      %p95 = scmp.eq.s32.totalorder %s31, 1
      %p96 = por %p94, %p95
      %p97 = scmp.ne.s32.totalorder %s88, %s89
      %p98 = scmp.eq.s32.totalorder %s31, 0
      %p99 = por %p97, %p98
      %p100 = scmp.ne.s32.totalorder %s88, %s89
      %p101 = scmp.eq.s32.totalorder %s32, 1
      %p102 = por %p100, %p101
      %p104 = scmp.ne.s32.totalorder %s89, %s103
      %p105 = scmp.eq.s32.totalorder %s32, 0
      %p106 = por %p104, %p105
      %s108 = sadd.s32 %s107, 1
      %p111 = scmp.eq.s32.totalorder %s26, 1
      %p112 = scmp.ne.s32.totalorder %s107, %s109
      %p113 = scmp.eq.s32.totalorder %s26, 0
      %p114 = por %p112, %p113
      %p115 = scmp.ne.s32.totalorder %s107, %s109
      %p116 = scmp.eq.s32.totalorder %s31, 1
      %p117 = por %p115, %p116
      %p118 = scmp.ne.s32.totalorder %s109, %s110
      %p119 = scmp.eq.s32.totalorder %s31, 0
      %p120 = por %p118, %p119
      %p121 = scmp.ne.s32.totalorder %s109, %s110
      %p122 = scmp.eq.s32.totalorder %s32, 1
      %p123 = por %p121, %p122
      %p125 = scmp.ne.s32.totalorder %s110, %s124
      %p126 = scmp.eq.s32.totalorder %s32, 0
      %p127 = por %p125, %p126
      %s129 = sadd.s32 %s128, 1
      %p132 = scmp.eq.s32.totalorder %s26, 1
      %p133 = scmp.ne.s32.totalorder %s128, %s130
      %p134 = scmp.eq.s32.totalorder %s26, 0
      %p135 = por %p133, %p134
      %p136 = scmp.ne.s32.totalorder %s128, %s130
      %p137 = scmp.eq.s32.totalorder %s31, 1
      %p138 = por %p136, %p137
      %p139 = scmp.ne.s32.totalorder %s130, %s131
      %p140 = scmp.eq.s32.totalorder %s31, 0
      %p141 = por %p139, %p140
      %p142 = scmp.ne.s32.totalorder %s130, %s131
      %p143 = scmp.eq.s32.totalorder %s32, 1
      %p144 = por %p142, %p143
      %p146 = scmp.ne.s32.totalorder %s131, %s145
      %p147 = scmp.eq.s32.totalorder %s32, 0
      %p148 = por %p146, %p147
      %s150 = sadd.s32 %s149, 1
      %p153 = scmp.eq.s32.totalorder %s26, 1
      %p154 = scmp.ne.s32.totalorder %s149, %s151
      %p155 = scmp.eq.s32.totalorder %s26, 0
      %p156 = por %p154, %p155
      %p157 = scmp.ne.s32.totalorder %s149, %s151
      %p158 = scmp.eq.s32.totalorder %s31, 1
      %p159 = por %p157, %p158
      %p160 = scmp.ne.s32.totalorder %s151, %s152
      %p161 = scmp.eq.s32.totalorder %s31, 0
      %p162 = por %p160, %p161
      %p163 = scmp.ne.s32.totalorder %s151, %s152
      %p164 = scmp.eq.s32.totalorder %s32, 1
      %p165 = por %p163, %p164
      %p167 = scmp.ne.s32.totalorder %s152, %s166
      %p168 = scmp.eq.s32.totalorder %s32, 0
      %p169 = por %p167, %p168
      %s171 = sadd.s32 %s170, 1
      %p174 = scmp.eq.s32.totalorder %s26, 1
      %p175 = scmp.ne.s32.totalorder %s170, %s172
      %p176 = scmp.eq.s32.totalorder %s26, 0
      %p177 = por %p175, %p176
      %p178 = scmp.ne.s32.totalorder %s170, %s172
      %p179 = scmp.eq.s32.totalorder %s31, 1
      %p180 = por %p178, %p179
      %p181 = scmp.ne.s32.totalorder %s172, %s173
      %p182 = scmp.eq.s32.totalorder %s31, 0
      %p183 = por %p181, %p182
      %p184 = scmp.ne.s32.totalorder %s172, %s173
      %p185 = scmp.eq.s32.totalorder %s32, 1
      %p186 = por %p184, %p185
      %p188 = scmp.ne.s32.totalorder %s173, %s187
      %p189 = scmp.eq.s32.totalorder %s32, 0
      %p190 = por %p188, %p189
      %s192 = sadd.s32 %s191, 1
      %p195 = scmp.eq.s32.totalorder %s26, 1
      %p196 = scmp.ne.s32.totalorder %s191, %s193
      %p197 = scmp.eq.s32.totalorder %s26, 0
      %p198 = por %p196, %p197
      %p199 = scmp.ne.s32.totalorder %s191, %s193
      %p200 = scmp.eq.s32.totalorder %s31, 1
      %p201 = por %p199, %p200
      %p202 = scmp.ne.s32.totalorder %s193, %s194
      %p203 = scmp.eq.s32.totalorder %s31, 0
      %p204 = por %p202, %p203
      %p205 = scmp.ne.s32.totalorder %s193, %s194
      %p206 = scmp.eq.s32.totalorder %s32, 1
      %p207 = por %p205, %p206
      %p209 = scmp.ne.s32.totalorder %s194, %s208
      %p210 = scmp.eq.s32.totalorder %s32, 0
      %p211 = por %p209, %p210
      %s213 = sadd.s32 %s212, 1
      %p216 = scmp.eq.s32.totalorder %s26, 1
      %p217 = scmp.ne.s32.totalorder %s212, %s214
      %p218 = scmp.eq.s32.totalorder %s26, 0
      %p219 = por %p217, %p218
      %p220 = scmp.ne.s32.totalorder %s212, %s214
      %p221 = scmp.eq.s32.totalorder %s31, 1
      %p222 = por %p220, %p221
      %p223 = scmp.ne.s32.totalorder %s214, %s215
      %p224 = scmp.eq.s32.totalorder %s31, 0
      %p225 = por %p223, %p224
      %p226 = scmp.ne.s32.totalorder %s214, %s215
      %p227 = scmp.eq.s32.totalorder %s32, 1
      %p228 = por %p226, %p227
      %p230 = scmp.ne.s32.totalorder %s215, %s229
      %p231 = scmp.eq.s32.totalorder %s32, 0
      %p232 = por %p230, %p231
      %s234 = sadd.s32 %s233, 1
      %p237 = scmp.eq.s32.totalorder %s26, 1
      %p238 = scmp.ne.s32.totalorder %s233, %s235
      %p239 = scmp.eq.s32.totalorder %s26, 0
      %p240 = por %p238, %p239
      %p241 = scmp.ne.s32.totalorder %s233, %s235
      %p242 = scmp.eq.s32.totalorder %s31, 1
      %p243 = por %p241, %p242
      %p244 = scmp.ne.s32.totalorder %s235, %s236
      %p245 = scmp.eq.s32.totalorder %s31, 0
      %p246 = por %p244, %p245
      %p247 = scmp.ne.s32.totalorder %s235, %s236
      %p248 = scmp.eq.s32.totalorder %s32, 1
      %p249 = por %p247, %p248
      %p251 = scmp.ne.s32.totalorder %s236, %s250
      %p252 = scmp.eq.s32.totalorder %s32, 0
      %p253 = por %p251, %p252
      %s254 = ssub.s32 %s26, %s33
      %p255 = scmp.eq.s32.totalorder %s254, 0
      %s257 = sadd.s32 %s256, 1
      %s258 = scalar_select %p255, %s256, %s257
      %p261 = pneg %p255
      %p262 = scmp.eq.s32.totalorder %s26, 1
      %p263 = por %p261, %p262
      %p264 = scmp.ne.s32.totalorder %s256, %s259
      %p265 = scmp.eq.s32.totalorder %s26, 0
      %p266 = por %p264, %p265
      %p267 = scmp.ne.s32.totalorder %s256, %s259
      %p268 = scmp.eq.s32.totalorder %s31, 1
      %p269 = por %p267, %p268
      %p270 = scmp.ne.s32.totalorder %s259, %s260
      %p271 = scmp.eq.s32.totalorder %s31, 0
      %p272 = por %p270, %p271
      %p273 = scmp.ne.s32.totalorder %s259, %s260
      %p274 = scmp.eq.s32.totalorder %s32, 1
      %p275 = por %p273, %p274
      %p277 = scmp.ne.s32.totalorder %s260, %s276
      %p278 = scmp.eq.s32.totalorder %s32, 0
      %p279 = por %p277, %p278
      %p280 = scmp.le.s32.totalorder 1, %s26
      %p281 = scmp.lt.s32.totalorder %s26, 3
      %p282 = pnand %p280, %p281
      %p283 = pneg %p282
      // Predicated region
      $region9: #{tpu_custom_call.1} parent=5 // pred_check
        _
      $region10: #{tpu_custom_call.1} parent=5 // pred_check_branch
        %285 = sbr.rel (%p282) target = $region12
      $region11: #{tpu_custom_call.1} parent=5 // pred_region
        %s286 = ssub.s32 %s26, 1
        // Predicated region
        $region13: #{tpu_custom_call.1} parent=11 // pred_check
          %p287 = pneg %p99
        $region14: #{tpu_custom_call.1} parent=11 // pred_check_branch
          %289 = sbr.rel (%p287) target = $region16
        $region15: #{tpu_custom_call.1} parent=11 // pred_region
          %s291 = ssub.s32 256, 256
          %292 = vsyncadd [#allocation6], %s291
          %s293 = sshll.u32 [#allocation7], 4
          %s294 = int_to_ptr.vmem [resolvable:$true] %s293
          %299 = dma.hbm_to_vmem [thread:$0]  %s2, 256, %s294, [#allocation6], 128, 128, 8
        $region16: #{tpu_custom_call.1} parent=11 // pred_fallthru
          _
        // Predicated region
        $region17: #{tpu_custom_call.1} parent=11 // pred_check
          %p300 = pneg %p120
        $region18: #{tpu_custom_call.1} parent=11 // pred_check_branch
          %302 = sbr.rel (%p300) target = $region20
        $region19: #{tpu_custom_call.1} parent=11 // pred_region
          _
        $region20: #{tpu_custom_call.1} parent=11 // pred_fallthru
          _
        // Predicated region
        $region21: #{tpu_custom_call.1} parent=11 // pred_check
          %p303 = pneg %p141
        $region22: #{tpu_custom_call.1} parent=11 // pred_check_branch
          %305 = sbr.rel (%p303) target = $region24
        $region23: #{tpu_custom_call.1} parent=11 // pred_region
          _
        $region24: #{tpu_custom_call.1} parent=11 // pred_fallthru
          _
        // Predicated region
        $region25: #{tpu_custom_call.1} parent=11 // pred_check
          %p306 = pneg %p162
        $region26: #{tpu_custom_call.1} parent=11 // pred_check_branch
          %308 = sbr.rel (%p306) target = $region28
        $region27: #{tpu_custom_call.1} parent=11 // pred_region
          _
        $region28: #{tpu_custom_call.1} parent=11 // pred_fallthru
          _
        // Predicated region
        $region29: #{tpu_custom_call.1} parent=11 // pred_check
          %p309 = pneg %p183
        $region30: #{tpu_custom_call.1} parent=11 // pred_check_branch
          %311 = sbr.rel (%p309) target = $region32
        $region31: #{tpu_custom_call.1} parent=11 // pred_region
          %s313 = ssub.s32 16, 16
          %314 = vsyncadd [#allocation9], %s313
          %s316 = sshll.u32 [#allocation8], 4
          %s317 = int_to_ptr.vmem [resolvable:$true] %s316
          %319 = dma.hbm_to_vmem [thread:$0]  %s6, 16, %s317, [#allocation9]
        $region32: #{tpu_custom_call.1} parent=11 // pred_fallthru
          _
        // Predicated region
        $region33: #{tpu_custom_call.1} parent=11 // pred_check
          %p320 = pneg %p204
        $region34: #{tpu_custom_call.1} parent=11 // pred_check_branch
          %322 = sbr.rel (%p320) target = $region36
        $region35: #{tpu_custom_call.1} parent=11 // pred_region
          _
        $region36: #{tpu_custom_call.1} parent=11 // pred_fallthru
          _
        // Predicated region
        $region37: #{tpu_custom_call.1} parent=11 // pred_check
          %p323 = pneg %p225
        $region38: #{tpu_custom_call.1} parent=11 // pred_check_branch
          %325 = sbr.rel (%p323) target = $region40
        $region39: #{tpu_custom_call.1} parent=11 // pred_region
          _
        $region40: #{tpu_custom_call.1} parent=11 // pred_fallthru
          _
        // Predicated region
        $region41: #{tpu_custom_call.1} parent=11 // pred_check
          %p326 = pneg %p246
        $region42: #{tpu_custom_call.1} parent=11 // pred_check_branch
          %328 = sbr.rel (%p326) target = $region44
        $region43: #{tpu_custom_call.1} parent=11 // pred_region
          _
        $region44: #{tpu_custom_call.1} parent=11 // pred_fallthru
          _
      $region12: #{tpu_custom_call.1} parent=5 // pred_fallthru
        _
      %p329 = scmp.lt.s32.totalorder %s26, 2
      // Predicated region
      $region45: #{tpu_custom_call.1} parent=5 // pred_check
        %p330 = pneg %p329
      $region46: #{tpu_custom_call.1} parent=5 // pred_check_branch
        %332 = sbr.rel (%p330) target = $region48
      $region47: #{tpu_custom_call.1} parent=5 // pred_region
        // Predicated region
        $region49: #{tpu_custom_call.1} parent=47 // pred_check
          %p333 = pneg %p46
        $region50: #{tpu_custom_call.1} parent=47 // pred_check_branch
          %335 = sbr.rel (%p333) target = $region52
        $region51: #{tpu_custom_call.1} parent=47 // pred_region
          %s336 = sand.u32 %s36, 1
          %s337 = scalar_lea.sflag [#allocation3], %s336
          %s338 = sand.u32 %s36, 1
          %s339 = smul.addr %s338, 8
          %s340 = scalar_lea.vmem [#allocation2], %s339
          %s342 = ssub.s32 128, 128
          %343 = vsyncadd %s337, %s342
          %s344 = smul.addr %s26, 128
          %s345 = scalar_lea.hbm %s0, %s344
          %s347 = sshll.u32 %s340, 4
          %s348 = int_to_ptr.vmem [resolvable:$true] %s347
          %350 = dma.hbm_to_vmem [thread:$0]  %s345, 128, %s348, %s337
        $region52: #{tpu_custom_call.1} parent=47 // pred_fallthru
          _
        // Predicated region
        $region53: #{tpu_custom_call.1} parent=47 // pred_check
          %p351 = pneg %p72
        $region54: #{tpu_custom_call.1} parent=47 // pred_check_branch
          %353 = sbr.rel (%p351) target = $region56
        $region55: #{tpu_custom_call.1} parent=47 // pred_region
          %s354 = sand.u32 %s26, 1
          %s355 = scalar_lea.sflag [#allocation6], %s354
          %s356 = sand.u32 %s62, 1
          %s357 = smul.addr %s356, 8
          %s358 = scalar_lea.vmem [#allocation5], %s357
          %s360 = ssub.s32 128, 128
          %361 = vsyncadd %s355, %s360
          %s362 = smul.addr %s26, 128
          %s363 = scalar_lea.hbm %s1, %s362
          %s365 = sshll.u32 %s358, 4
          %s366 = int_to_ptr.vmem [resolvable:$true] %s365
          %368 = dma.hbm_to_vmem [thread:$0]  %s363, 128, %s366, %s355
        $region56: #{tpu_custom_call.1} parent=47 // pred_fallthru
          _
      $region48: #{tpu_custom_call.1} parent=5 // pred_fallthru
        _
      %p369 = scmp.le.s32.totalorder 1, %s26
      %p370 = scmp.lt.s32.totalorder %s26, 3
      %p371 = pnand %p369, %p370
      %p372 = pneg %p371
      // Predicated region
      $region57: #{tpu_custom_call.1} parent=5 // pred_check
        _
      $region58: #{tpu_custom_call.1} parent=5 // pred_check_branch
        %374 = sbr.rel (%p371) target = $region60
      $region59: #{tpu_custom_call.1} parent=5 // pred_region
        %s375 = ssub.s32 %s26, 1
        %s376 = sand.u32 %s39, 1
        %s377 = scalar_lea.sflag [#allocation3], %s376
        %s378 = sand.u32 %s39, 1
        %s379 = smul.addr %s378, 8
        %s380 = scalar_lea.vmem [#allocation2], %s379
        // Predicated region
        $region61: #{tpu_custom_call.1} parent=59 // pred_check
          %p381 = pneg %p52
        $region62: #{tpu_custom_call.1} parent=59 // pred_check_branch
          %383 = sbr.rel (%p381) target = $region64
        $region63: #{tpu_custom_call.1} parent=59 // pred_region
          %384 = dma.done %s377, 128
        $region64: #{tpu_custom_call.1} parent=59 // pred_fallthru
          _
        %s385 = sand.u32 %s31, 1
        %s386 = scalar_lea.sflag [#allocation6], %s385
        %s387 = sand.u32 %s65, 1
        %s388 = smul.addr %s387, 8
        %s389 = scalar_lea.vmem [#allocation5], %s388
        // Predicated region
        $region65: #{tpu_custom_call.1} parent=59 // pred_check
          %p390 = pneg %p78
        $region66: #{tpu_custom_call.1} parent=59 // pred_check_branch
          %392 = sbr.rel (%p390) target = $region68
        $region67: #{tpu_custom_call.1} parent=59 // pred_region
          %393 = dma.done %s386, 128
        $region68: #{tpu_custom_call.1} parent=59 // pred_fallthru
          _
        // Predicated region
        $region69: #{tpu_custom_call.1} parent=59 // pred_check
          %p394 = pneg %p99
        $region70: #{tpu_custom_call.1} parent=59 // pred_check_branch
          %396 = sbr.rel (%p394) target = $region72
        $region71: #{tpu_custom_call.1} parent=59 // pred_region
          %397 = dma.done [#allocation6], 256
        $region72: #{tpu_custom_call.1} parent=59 // pred_fallthru
          _
        // Predicated region
        $region73: #{tpu_custom_call.1} parent=59 // pred_check
          %p398 = pneg %p183
        $region74: #{tpu_custom_call.1} parent=59 // pred_check_branch
          %400 = sbr.rel (%p398) target = $region76
        $region75: #{tpu_custom_call.1} parent=59 // pred_region
          %401 = dma.done [#allocation9], 16
        $region76: #{tpu_custom_call.1} parent=59 // pred_fallthru
          _
        %s402 = sand.u32 %s39, 1
        %s403 = scalar_lea.sflag [#allocation3], %s402
        %s404 = sand.u32 %s39, 1
        %s405 = smul.addr %s404, 8
        %s406 = scalar_lea.vmem [#allocation2], %s405
        %p407 = pneg %p52
        %p408 = pneg %p49
        %s409 = sand.u32 %s31, 1
        %s410 = scalar_lea.sflag [#allocation6], %s409
        %s411 = sand.u32 %s65, 1
        %s412 = smul.addr %s411, 8
        %s413 = scalar_lea.vmem [#allocation5], %s412
        %p414 = pneg %p78
        %p415 = pneg %p75
        %p416 = pneg %p99
        %p417 = pneg %p96
        %p418 = pneg %p120
        %p419 = pneg %p117
        %p420 = pneg %p141
        %p421 = pneg %p138
        %p422 = pneg %p162
        %p423 = pneg %p159
        %p424 = pneg %p183
        %p425 = pneg %p180
        %p426 = pneg %p204
        %p427 = pneg %p201
        %p428 = pneg %p225
        %p429 = pneg %p222
        %p430 = pneg %p246
        %p431 = pneg %p243
        %p432 = pneg %p272
        %p433 = pneg %p269
        %s434 = sand.u32 %s259, 1
        %s435 = scalar_lea.sflag [#allocation4], %s434
        %s436 = sand.u32 %s259, 1
        %s437 = smul.addr %s436, 8
        %s438 = scalar_lea.vmem [#allocation10], %s437
        %v439 = vld [vmem:[%s380] sm:$0xff]
        %v440 = vld [vmem:[%s389] sm:$0xff]
        %v441 = vld [vmem:[#allocation7] sm:$0xff]
        %v442 = vld [vmem:[#allocation7 + $0x8] sm:$0xff]
        %vm443 = vcmask 130048
        %v445 = vsel %vm443, %v439, 0
        %447 = vmatprep.subr.mxu0 0.0
        %448 = vmatpush1.msra.mxu0 %v441
        %449 = vmatprep.subr.mxu0 0.0
        %450 = vmatpush1.msra.mxu0 %v442
        %451 = vmatprep.subr.mxu0 0.0
        %452 = vmatpush1.msra.mxu0 0.0
        %453 = vmatprep.subr.mxu0 0.0
        %454 = vmatpush1.msra.mxu0 0.0
        %455 = vmatprep.subr.mxu0 0.0
        %456 = vmatpush1.msra.mxu0 0.0
        %457 = vmatprep.subr.mxu0 0.0
        %458 = vmatpush1.msra.mxu0 0.0
        %459 = vmatprep.subr.mxu0 0.0
        %460 = vmatpush1.msra.mxu0 0.0
        %461 = vmatprep.subr.mxu0 0.0
        %462 = vmatpush1.msra.mxu0 0.0
        %463 = vmatprep.subr.mxu0 0.0
        %464 = vmatpush1.msra.mxu0 0.0
        %465 = vmatprep.subr.mxu0 0.0
        %466 = vmatpush1.msra.mxu0 0.0
        %467 = vmatprep.subr.mxu0 0.0
        %468 = vmatpush1.msra.mxu0 0.0
        %469 = vmatprep.subr.mxu0 0.0
        %470 = vmatpush1.msra.mxu0 0.0
        %471 = vmatprep.subr.mxu0 0.0
        %472 = vmatpush1.msra.mxu0 0.0
        %473 = vmatprep.subr.mxu0 0.0
        %474 = vmatpush1.msra.mxu0 0.0
        %475 = vmatprep.subr.mxu0 0.0
        %476 = vmatpush1.msra.mxu0 0.0
        %477 = vmatprep.subr.mxu0 0.0
        %478 = vmatpush1.msra.mxu0 0.0
        %479 = vmatprep.subr.mxu0 0.0
        %480 = vmatpush1.msra.mxu0 0.0
        %481 = vmatprep.subr.mxu0 0.0
        %482 = vmatpush1.msra.mxu0 0.0
        %483 = vmatprep.subr.mxu0 0.0
        %484 = vmatpush1.msra.mxu0 0.0
        %485 = vmatprep.subr.mxu0 0.0
        %486 = vmatpush1.msra.mxu0 0.0
        %487 = vmatprep.subr.mxu0 0.0
        %488 = vmatpush1.msra.mxu0 0.0
        %489 = vmatprep.subr.mxu0 0.0
        %490 = vmatpush1.msra.mxu0 0.0
        %491 = vmatprep.subr.mxu0 0.0
        %492 = vmatpush1.msra.mxu0 0.0
        %493 = vmatprep.subr.mxu0 0.0
        %494 = vmatpush1.msra.mxu0 0.0
        %495 = vmatprep.subr.mxu0 0.0
        %496 = vmatpush1.msra.mxu0 0.0
        %497 = vmatprep.subr.mxu0 0.0
        %498 = vmatpush1.msra.mxu0 0.0
        %499 = vmatprep.subr.mxu0 0.0
        %500 = vmatpush1.msra.mxu0 0.0
        %501 = vmatprep.subr.mxu0 0.0
        %502 = vmatpush1.msra.mxu0 0.0
        %503 = vmatprep.subr.mxu0 0.0
        %504 = vmatpush1.msra.mxu0 0.0
        %505 = vmatprep.subr.mxu0 0.0
        %506 = vmatpush1.msra.mxu0 0.0
        %507 = vmatprep.subr.mxu0 0.0
        %508 = vmatpush1.msra.mxu0 0.0
        %509 = vmatprep.subr.mxu0 0.0
        %510 = vmatpush1.msra.mxu0 0.0
        %511 = vmatprep.mubr.f32.mxu0 0.0
        %512 = vmatmul.mubr.f32.gmra.mrb[0].mxu0 %v445
        %v513 = vpop.f32.mrb[0].mxu0
        %v514 = vadd.f32 0.0, %v513
        %v515 = vpop.f32.mrb[0].mxu0
        %516 = vdwg.mxu0
        %v517 = vld [vmem:[%s3] sm:$0xff]
        %v518 = vld [vmem:[%s3 + $0x8] sm:$0xff]
        %v519 = vld [vmem:[%s3 + $0x10] sm:$0xff]
        %v520 = vld [vmem:[%s3 + $0x18] sm:$0xff]
        %vm521 = vcmask 261120
        %v523 = vsel %vm521, %v440, 0
        %525 = vmatprep.subr.mxu0 0.0
        %526 = vmatpush1.msra.mxu0 %v517
        %527 = vmatprep.subr.mxu0 0.0
        %528 = vmatpush1.msra.mxu0 %v518
        %529 = vmatprep.subr.mxu0 0.0
        %530 = vmatpush1.msra.mxu0 %v519
        %531 = vmatprep.subr.mxu0 0.0
        %532 = vmatpush1.msra.mxu0 %v520
        %533 = vmatprep.subr.mxu0 0.0
        %534 = vmatpush1.msra.mxu0 0.0
        %535 = vmatprep.subr.mxu0 0.0
        %536 = vmatpush1.msra.mxu0 0.0
        %537 = vmatprep.subr.mxu0 0.0
        %538 = vmatpush1.msra.mxu0 0.0
        %539 = vmatprep.subr.mxu0 0.0
        %540 = vmatpush1.msra.mxu0 0.0
        %541 = vmatprep.subr.mxu0 0.0
        %542 = vmatpush1.msra.mxu0 0.0
        %543 = vmatprep.subr.mxu0 0.0
        %544 = vmatpush1.msra.mxu0 0.0
        %545 = vmatprep.subr.mxu0 0.0
        %546 = vmatpush1.msra.mxu0 0.0
        %547 = vmatprep.subr.mxu0 0.0
        %548 = vmatpush1.msra.mxu0 0.0
        %549 = vmatprep.subr.mxu0 0.0
        %550 = vmatpush1.msra.mxu0 0.0
        %551 = vmatprep.subr.mxu0 0.0
        %552 = vmatpush1.msra.mxu0 0.0
        %553 = vmatprep.subr.mxu0 0.0
        %554 = vmatpush1.msra.mxu0 0.0
        %555 = vmatprep.subr.mxu0 0.0
        %556 = vmatpush1.msra.mxu0 0.0
        %557 = vmatprep.subr.mxu0 0.0
        %558 = vmatpush1.msra.mxu0 0.0
        %559 = vmatprep.subr.mxu0 0.0
        %560 = vmatpush1.msra.mxu0 0.0
        %561 = vmatprep.subr.mxu0 0.0
        %562 = vmatpush1.msra.mxu0 0.0
        %563 = vmatprep.subr.mxu0 0.0
        %564 = vmatpush1.msra.mxu0 0.0
        %565 = vmatprep.subr.mxu0 0.0
        %566 = vmatpush1.msra.mxu0 0.0
        %567 = vmatprep.subr.mxu0 0.0
        %568 = vmatpush1.msra.mxu0 0.0
        %569 = vmatprep.subr.mxu0 0.0
        %570 = vmatpush1.msra.mxu0 0.0
        %571 = vmatprep.subr.mxu0 0.0
        %572 = vmatpush1.msra.mxu0 0.0
        %573 = vmatprep.subr.mxu0 0.0
        %574 = vmatpush1.msra.mxu0 0.0
        %575 = vmatprep.subr.mxu0 0.0
        %576 = vmatpush1.msra.mxu0 0.0
        %577 = vmatprep.subr.mxu0 0.0
        %578 = vmatpush1.msra.mxu0 0.0
        %579 = vmatprep.subr.mxu0 0.0
        %580 = vmatpush1.msra.mxu0 0.0
        %581 = vmatprep.subr.mxu0 0.0
        %582 = vmatpush1.msra.mxu0 0.0
        %583 = vmatprep.subr.mxu0 0.0
        %584 = vmatpush1.msra.mxu0 0.0
        %585 = vmatprep.subr.mxu0 0.0
        %586 = vmatpush1.msra.mxu0 0.0
        %587 = vmatprep.subr.mxu0 0.0
        %588 = vmatpush1.msra.mxu0 0.0
        %589 = vmatprep.mubr.f32.mxu0 0.0
        %590 = vmatmul.mubr.f32.gmra.mrb[0].mxu0 %v523
        %v591 = vpop.f32.mrb[0].mxu0
        %v592 = vadd.f32 0.0, %v591
        %v593 = vpop.f32.mrb[0].mxu0
        %594 = vdwg.mxu0
        %v595 = vadd.f32 %v514, %v592
        %v596 = vld [vmem:[%s4] sm:$0x1]
        %v598 = vlaneseq
        %v599 = vshrl.u32 %v598, 7
        %v600 = vsub.s32 0, %v599
        %v601 = vrot.slane %v596, %v600
        %v603 = vadd.f32 %v595, %v601
        %v604 = vxor.u32 %v603, 2147483648
        %v605 = vmul.f32 %v604, 1.442695
        %v606 = vpow.pop %v605
        %v607 = vadd.f32 %v606, 1.0
        %v608 = vrcp.pop %v607
        %v609 = vmul.f32 1.0, %v608
        %v610 = vld [vmem:[%s5] sm:$0x1]
        %v612 = vlaneseq
        %v613 = vshrl.u32 %v612, 7
        %v614 = vsub.s32 0, %v613
        %v615 = vrot.slane %v610, %v614
        %616 = vrot.lane.b32.xlu0 %v615, 64
        %v617 = vpop.permute.xlu0 %616
        %v619 = vadd.f32 %v514, %v617
        %v620 = vld [vmem:[#allocation8] sm:$0x1]
        %v622 = vlaneseq
        %v623 = vshrl.u32 %v622, 7
        %v624 = vsub.s32 0, %v623
        %v625 = vrot.slane %v620, %v624
        %626 = vrot.lane.b32.xlu0 %v625, 64
        %v627 = vpop.permute.xlu0 %626
        %v629 = vadd.f32 %v592, %v627
        %631 = vrot.lane.b32.xlu0 %v629, 64
        %v632 = vpop.permute.xlu0 %631
        %v634 = vmul.f32 %v609, %v632
        %636 = vrot.lane.b32.xlu0 %v634, 64
        %v637 = vpop.permute.xlu0 %636
        %v639 = vadd.f32 %v619, %v637
        %v640 = vtanh.pop %v639
        %v641 = vsub.f32 1.0, %v609
        %643 = vrot.lane.b32.xlu0 %v640, 96
        %v644 = vpop.permute.xlu0 %643
        %v646 = vmul.f32 %v641, %v644
        %647 = vrot.lane.b32.xlu0 %v440, 32
        %v648 = vpop.permute.xlu0 %647
        %v650 = vmul.f32 %v609, %v648
        %v651 = vadd.f32 %v646, %v650
        %v652 = vlaneseq
        %v653 = vshrl.u32 %v652, 7
        %v654 = vadd.s32 %v653, 8
        %v655 = vadd.s32 %v653, 16
        %v656 = vadd.s32 %v653, 24
        %v657 = vlaneseq
        %v658 = vand.u32 %v657, 127
        %v659 = vlaneseq
        %v660 = vshrl.u32 %v659, 7
        %v661 = vsub.s32 0, %v660
        %v662 = vrot.slane %v651, %v661
        %s664 = sor.u32 256, 32
        %665 = vbcast.lane.b32.xlu0 %v662, %s664
        %v666 = vpop.permute.xlu0 %665
        %s668 = sor.u32 256, 40
        %669 = vbcast.lane.b32.xlu0 %v662, %s668
        %v670 = vpop.permute.xlu0 %669
        %s672 = sor.u32 256, 48
        %673 = vbcast.lane.b32.xlu0 %v662, %s672
        %v674 = vpop.permute.xlu0 %673
        %s676 = sor.u32 256, 56
        %677 = vbcast.lane.b32.xlu0 %v662, %s676
        %v678 = vpop.permute.xlu0 %677
        %v679 = vlaneseq
        %v680 = vshrl.u32 %v679, 7
        %v681 = vsub.s32 1, %v680
        %v682 = vrot.slane %v651, %v681
        %s684 = sor.u32 256, 32
        %685 = vbcast.lane.b32.xlu0 %v682, %s684
        %v686 = vpop.permute.xlu0 %685
        %s688 = sor.u32 256, 40
        %689 = vbcast.lane.b32.xlu0 %v682, %s688
        %v690 = vpop.permute.xlu0 %689
        %s692 = sor.u32 256, 48
        %693 = vbcast.lane.b32.xlu0 %v682, %s692
        %v694 = vpop.permute.xlu0 %693
        %s696 = sor.u32 256, 56
        %697 = vbcast.lane.b32.xlu0 %v682, %s696
        %v698 = vpop.permute.xlu0 %697
        %v699 = vlaneseq
        %v700 = vshrl.u32 %v699, 7
        %v701 = vsub.s32 2, %v700
        %v702 = vrot.slane %v651, %v701
        %s704 = sor.u32 256, 32
        %705 = vbcast.lane.b32.xlu0 %v702, %s704
        %v706 = vpop.permute.xlu0 %705
        %s708 = sor.u32 256, 40
        %709 = vbcast.lane.b32.xlu0 %v702, %s708
        %v710 = vpop.permute.xlu0 %709
        %s712 = sor.u32 256, 48
        %713 = vbcast.lane.b32.xlu0 %v702, %s712
        %v714 = vpop.permute.xlu0 %713
        %s716 = sor.u32 256, 56
        %717 = vbcast.lane.b32.xlu0 %v702, %s716
        %v718 = vpop.permute.xlu0 %717
        %v719 = vlaneseq
        %v720 = vshrl.u32 %v719, 7
        %v721 = vsub.s32 3, %v720
        %v722 = vrot.slane %v651, %v721
        %s724 = sor.u32 256, 32
        %725 = vbcast.lane.b32.xlu0 %v722, %s724
        %v726 = vpop.permute.xlu0 %725
        %s728 = sor.u32 256, 40
        %729 = vbcast.lane.b32.xlu0 %v722, %s728
        %v730 = vpop.permute.xlu0 %729
        %s732 = sor.u32 256, 48
        %733 = vbcast.lane.b32.xlu0 %v722, %s732
        %v734 = vpop.permute.xlu0 %733
        %s736 = sor.u32 256, 56
        %737 = vbcast.lane.b32.xlu0 %v722, %s736
        %v738 = vpop.permute.xlu0 %737
        %v739 = vlaneseq
        %v740 = vshrl.u32 %v739, 7
        %v741 = vsub.s32 4, %v740
        %v742 = vrot.slane %v651, %v741
        %s744 = sor.u32 256, 32
        %745 = vbcast.lane.b32.xlu0 %v742, %s744
        %v746 = vpop.permute.xlu0 %745
        %s748 = sor.u32 256, 40
        %749 = vbcast.lane.b32.xlu0 %v742, %s748
        %v750 = vpop.permute.xlu0 %749
        %s752 = sor.u32 256, 48
        %753 = vbcast.lane.b32.xlu0 %v742, %s752
        %v754 = vpop.permute.xlu0 %753
        %s756 = sor.u32 256, 56
        %757 = vbcast.lane.b32.xlu0 %v742, %s756
        %v758 = vpop.permute.xlu0 %757
        %v759 = vlaneseq
        %v760 = vshrl.u32 %v759, 7
        %v761 = vsub.s32 5, %v760
        %v762 = vrot.slane %v651, %v761
        %s764 = sor.u32 256, 32
        %765 = vbcast.lane.b32.xlu0 %v762, %s764
        %v766 = vpop.permute.xlu0 %765
        %s768 = sor.u32 256, 40
        %769 = vbcast.lane.b32.xlu0 %v762, %s768
        %v770 = vpop.permute.xlu0 %769
        %s772 = sor.u32 256, 48
        %773 = vbcast.lane.b32.xlu0 %v762, %s772
        %v774 = vpop.permute.xlu0 %773
        %s776 = sor.u32 256, 56
        %777 = vbcast.lane.b32.xlu0 %v762, %s776
        %v778 = vpop.permute.xlu0 %777
        %v779 = vlaneseq
        %v780 = vshrl.u32 %v779, 7
        %v781 = vsub.s32 6, %v780
        %v782 = vrot.slane %v651, %v781
        %s784 = sor.u32 256, 32
        %785 = vbcast.lane.b32.xlu0 %v782, %s784
        %v786 = vpop.permute.xlu0 %785
        %s788 = sor.u32 256, 40
        %789 = vbcast.lane.b32.xlu0 %v782, %s788
        %v790 = vpop.permute.xlu0 %789
        %s792 = sor.u32 256, 48
        %793 = vbcast.lane.b32.xlu0 %v782, %s792
        %v794 = vpop.permute.xlu0 %793
        %s796 = sor.u32 256, 56
        %797 = vbcast.lane.b32.xlu0 %v782, %s796
        %v798 = vpop.permute.xlu0 %797
        %v799 = vlaneseq
        %v800 = vshrl.u32 %v799, 7
        %v801 = vsub.s32 7, %v800
        %v802 = vrot.slane %v651, %v801
        %s804 = sor.u32 256, 32
        %805 = vbcast.lane.b32.xlu0 %v802, %s804
        %v806 = vpop.permute.xlu0 %805
        %s808 = sor.u32 256, 40
        %809 = vbcast.lane.b32.xlu0 %v802, %s808
        %v810 = vpop.permute.xlu0 %809
        %s812 = sor.u32 256, 48
        %813 = vbcast.lane.b32.xlu0 %v802, %s812
        %v814 = vpop.permute.xlu0 %813
        %s816 = sor.u32 256, 56
        %817 = vbcast.lane.b32.xlu0 %v802, %s816
        %v818 = vpop.permute.xlu0 %817
        %v820 = vcombine.high %v651, %v651
        %v822 = vunpack.c.l.s4 1966171168
        %v823 = vunpack.c.0.s8 %v822
        %v824 = vlaneseq
        %v825 = vshrl.u32 %v824, 7
        %v826 = vsub.s32 %v823, %v825
        %v827 = vrot.slane %v651, %v826
        %v829 = vunpack.c.l.s4 1966171168
        %v830 = vunpack.c.0.s8 %v829
        %v831 = vlaneseq
        %v832 = vshrl.u32 %v831, 7
        %v833 = vsub.s32 %v830, %v832
        %v834 = vrot.slane %v820, %v833
        %v835 = vcombine.high %v827, %v827
        %v836 = vcombine.high %v834, %v834
        %v838 = vunpack.c.l.s4 1966171168
        %v839 = vunpack.c.0.s8 %v838
        %v840 = vlaneseq
        %v841 = vshrl.u32 %v840, 7
        %v842 = vsub.s32 %v839, %v841
        %v843 = vrot.slane %v827, %v842
        %v845 = vunpack.c.l.s4 1966171168
        %v846 = vunpack.c.0.s8 %v845
        %v847 = vlaneseq
        %v848 = vshrl.u32 %v847, 7
        %v849 = vsub.s32 %v846, %v848
        %v850 = vrot.slane %v834, %v849
        %v852 = vunpack.c.l.s4 1966171168
        %v853 = vunpack.c.0.s8 %v852
        %v854 = vlaneseq
        %v855 = vshrl.u32 %v854, 7
        %v856 = vsub.s32 %v853, %v855
        %v857 = vrot.slane %v835, %v856
        %v859 = vunpack.c.l.s4 1966171168
        %v860 = vunpack.c.0.s8 %v859
        %v861 = vlaneseq
        %v862 = vshrl.u32 %v861, 7
        %v863 = vsub.s32 %v860, %v862
        %v864 = vrot.slane %v836, %v863
        %v865 = vcombine.high %v843, %v843
        %v866 = vcombine.high %v850, %v850
        %v867 = vcombine.high %v857, %v857
        %v868 = vcombine.high %v864, %v864
        %v869 = vlaneseq
        %v870 = vshrl.u32 %v869, 7
        %v871 = vsub.s32 0, %v870
        %v872 = vrot.slane %v843, %v871
        %v873 = vlaneseq
        %v874 = vshrl.u32 %v873, 7
        %v875 = vsub.s32 0, %v874
        %v876 = vrot.slane %v857, %v875
        %v877 = vlaneseq
        %v878 = vshrl.u32 %v877, 7
        %v879 = vsub.s32 0, %v878
        %v880 = vrot.slane %v865, %v879
        %v881 = vlaneseq
        %v882 = vshrl.u32 %v881, 7
        %v883 = vsub.s32 0, %v882
        %v884 = vrot.slane %v867, %v883
        %v885 = vlaneseq
        %v886 = vshrl.u32 %v885, 7
        %v887 = vsub.s32 0, %v886
        %v888 = vrot.slane %v850, %v887
        %v889 = vlaneseq
        %v890 = vshrl.u32 %v889, 7
        %v891 = vsub.s32 0, %v890
        %v892 = vrot.slane %v864, %v891
        %v893 = vlaneseq
        %v894 = vshrl.u32 %v893, 7
        %v895 = vsub.s32 0, %v894
        %v896 = vrot.slane %v866, %v895
        %v897 = vlaneseq
        %v898 = vshrl.u32 %v897, 7
        %v899 = vsub.s32 0, %v898
        %v900 = vrot.slane %v868, %v899
        %vm909 = vcmp.lt.f32.partialorder %v666, %v872
        %vm910 = vcmp.lt.f32.partialorder %v670, %v872
        %vm911 = vcmp.lt.f32.partialorder %v674, %v872
        %vm912 = vcmp.lt.f32.partialorder %v678, %v872
        %vm913 = vcmp.lt.f32.partialorder %v686, %v876
        %vm914 = vcmp.lt.f32.partialorder %v690, %v876
        %vm915 = vcmp.lt.f32.partialorder %v694, %v876
        %vm916 = vcmp.lt.f32.partialorder %v698, %v876
        %vm917 = vcmp.lt.f32.partialorder %v706, %v880
        %vm918 = vcmp.lt.f32.partialorder %v710, %v880
        %vm919 = vcmp.lt.f32.partialorder %v714, %v880
        %vm920 = vcmp.lt.f32.partialorder %v718, %v880
        %vm921 = vcmp.lt.f32.partialorder %v726, %v884
        %vm922 = vcmp.lt.f32.partialorder %v730, %v884
        %vm923 = vcmp.lt.f32.partialorder %v734, %v884
        %vm924 = vcmp.lt.f32.partialorder %v738, %v884
        %vm925 = vcmp.lt.f32.partialorder %v746, %v888
        %vm926 = vcmp.lt.f32.partialorder %v750, %v888
        %vm927 = vcmp.lt.f32.partialorder %v754, %v888
        %vm928 = vcmp.lt.f32.partialorder %v758, %v888
        %vm929 = vcmp.lt.f32.partialorder %v766, %v892
        %vm930 = vcmp.lt.f32.partialorder %v770, %v892
        %vm931 = vcmp.lt.f32.partialorder %v774, %v892
        %vm932 = vcmp.lt.f32.partialorder %v778, %v892
        %vm933 = vcmp.lt.f32.partialorder %v786, %v896
        %vm934 = vcmp.lt.f32.partialorder %v790, %v896
        %vm935 = vcmp.lt.f32.partialorder %v794, %v896
        %vm936 = vcmp.lt.f32.partialorder %v798, %v896
        %vm937 = vcmp.lt.f32.partialorder %v806, %v900
        %vm938 = vcmp.lt.f32.partialorder %v810, %v900
        %vm939 = vcmp.lt.f32.partialorder %v814, %v900
        %vm940 = vcmp.lt.f32.partialorder %v818, %v900
        %vm941 = vcmp.eq.f32.partialorder %v666, %v872
        %vm942 = vcmp.eq.f32.partialorder %v670, %v872
        %vm943 = vcmp.eq.f32.partialorder %v674, %v872
        %vm944 = vcmp.eq.f32.partialorder %v678, %v872
        %vm945 = vcmp.eq.f32.partialorder %v686, %v876
        %vm946 = vcmp.eq.f32.partialorder %v690, %v876
        %vm947 = vcmp.eq.f32.partialorder %v694, %v876
        %vm948 = vcmp.eq.f32.partialorder %v698, %v876
        %vm949 = vcmp.eq.f32.partialorder %v706, %v880
        %vm950 = vcmp.eq.f32.partialorder %v710, %v880
        %vm951 = vcmp.eq.f32.partialorder %v714, %v880
        %vm952 = vcmp.eq.f32.partialorder %v718, %v880
        %vm953 = vcmp.eq.f32.partialorder %v726, %v884
        %vm954 = vcmp.eq.f32.partialorder %v730, %v884
        %vm955 = vcmp.eq.f32.partialorder %v734, %v884
        %vm956 = vcmp.eq.f32.partialorder %v738, %v884
        %vm957 = vcmp.eq.f32.partialorder %v746, %v888
        %vm958 = vcmp.eq.f32.partialorder %v750, %v888
        %vm959 = vcmp.eq.f32.partialorder %v754, %v888
        %vm960 = vcmp.eq.f32.partialorder %v758, %v888
        %vm961 = vcmp.eq.f32.partialorder %v766, %v892
        %vm962 = vcmp.eq.f32.partialorder %v770, %v892
        %vm963 = vcmp.eq.f32.partialorder %v774, %v892
        %vm964 = vcmp.eq.f32.partialorder %v778, %v892
        %vm965 = vcmp.eq.f32.partialorder %v786, %v896
        %vm966 = vcmp.eq.f32.partialorder %v790, %v896
        %vm967 = vcmp.eq.f32.partialorder %v794, %v896
        %vm968 = vcmp.eq.f32.partialorder %v798, %v896
        %vm969 = vcmp.eq.f32.partialorder %v806, %v900
        %vm970 = vcmp.eq.f32.partialorder %v810, %v900
        %vm971 = vcmp.eq.f32.partialorder %v814, %v900
        %vm972 = vcmp.eq.f32.partialorder %v818, %v900
        %vm973 = vcmp.lt.s32.totalorder %v653, %v658
        %vm974 = vcmp.lt.s32.totalorder %v654, %v658
        %vm975 = vcmp.lt.s32.totalorder %v655, %v658
        %vm976 = vcmp.lt.s32.totalorder %v656, %v658
        %v977 = vsel %vm973, 1, 0
        %v978 = vsel %vm974, 1, 0
        %v979 = vsel %vm975, 1, 0
        %v980 = vsel %vm976, 1, 0
        %vm981 = vcmp.eq.s32.totalorder %v977, 1
        %vm982 = vcmp.eq.s32.totalorder %v978, 1
        %vm983 = vcmp.eq.s32.totalorder %v979, 1
        %vm984 = vcmp.eq.s32.totalorder %v980, 1
        %v985 = vsel %vm981, 1, 0
        %v986 = vsel %vm982, 1, 0
        %v987 = vsel %vm983, 1, 0
        %v988 = vsel %vm984, 1, 0
        %989 = vrot.lane.b32.xlu0 %v985, 32
        %v990 = vpop.permute.xlu0 %989
        %991 = vrot.lane.b32.xlu0 %v986, 32
        %v992 = vpop.permute.xlu0 %991
        %993 = vrot.lane.b32.xlu0 %v987, 32
        %v994 = vpop.permute.xlu0 %993
        %995 = vrot.lane.b32.xlu0 %v988, 32
        %v996 = vpop.permute.xlu0 %995
        %vm997 = vcmp.ne.s32.totalorder %v990, 0
        %vm998 = vcmp.ne.s32.totalorder %v992, 0
        %vm999 = vcmp.ne.s32.totalorder %v994, 0
        %vm1000 = vcmp.ne.s32.totalorder %v996, 0
        %vm1001 = vmand %vm941, %vm997
        %vm1002 = vmand %vm942, %vm998
        %vm1003 = vmand %vm943, %vm999
        %vm1004 = vmand %vm944, %vm1000
        %vm1005 = vmand %vm945, %vm997
        %vm1006 = vmand %vm946, %vm998
        %vm1007 = vmand %vm947, %vm999
        %vm1008 = vmand %vm948, %vm1000
        %vm1009 = vmand %vm949, %vm997
        %vm1010 = vmand %vm950, %vm998
        %vm1011 = vmand %vm951, %vm999
        %vm1012 = vmand %vm952, %vm1000
        %vm1013 = vmand %vm953, %vm997
        %vm1014 = vmand %vm954, %vm998
        %vm1015 = vmand %vm955, %vm999
        %vm1016 = vmand %vm956, %vm1000
        %vm1017 = vmand %vm957, %vm997
        %vm1018 = vmand %vm958, %vm998
        %vm1019 = vmand %vm959, %vm999
        %vm1020 = vmand %vm960, %vm1000
        %vm1021 = vmand %vm961, %vm997
        %vm1022 = vmand %vm962, %vm998
        %vm1023 = vmand %vm963, %vm999
        %vm1024 = vmand %vm964, %vm1000
        %vm1025 = vmand %vm965, %vm997
        %vm1026 = vmand %vm966, %vm998
        %vm1027 = vmand %vm967, %vm999
        %vm1028 = vmand %vm968, %vm1000
        %vm1029 = vmand %vm969, %vm997
        %vm1030 = vmand %vm970, %vm998
        %vm1031 = vmand %vm971, %vm999
        %vm1032 = vmand %vm972, %vm1000
        %vm1033 = vmor %vm909, %vm1001
        %vm1034 = vmor %vm910, %vm1002
        %vm1035 = vmor %vm911, %vm1003
        %vm1036 = vmor %vm912, %vm1004
        %vm1037 = vmor %vm913, %vm1005
        %vm1038 = vmor %vm914, %vm1006
        %vm1039 = vmor %vm915, %vm1007
        %vm1040 = vmor %vm916, %vm1008
        %vm1041 = vmor %vm917, %vm1009
        %vm1042 = vmor %vm918, %vm1010
        %vm1043 = vmor %vm919, %vm1011
        %vm1044 = vmor %vm920, %vm1012
        %vm1045 = vmor %vm921, %vm1013
        %vm1046 = vmor %vm922, %vm1014
        %vm1047 = vmor %vm923, %vm1015
        %vm1048 = vmor %vm924, %vm1016
        %vm1049 = vmor %vm925, %vm1017
        %vm1050 = vmor %vm926, %vm1018
        %vm1051 = vmor %vm927, %vm1019
        %vm1052 = vmor %vm928, %vm1020
        %vm1053 = vmor %vm929, %vm1021
        %vm1054 = vmor %vm930, %vm1022
        %vm1055 = vmor %vm931, %vm1023
        %vm1056 = vmor %vm932, %vm1024
        %vm1057 = vmor %vm933, %vm1025
        %vm1058 = vmor %vm934, %vm1026
        %vm1059 = vmor %vm935, %vm1027
        %vm1060 = vmor %vm936, %vm1028
        %vm1061 = vmor %vm937, %vm1029
        %vm1062 = vmor %vm938, %vm1030
        %vm1063 = vmor %vm939, %vm1031
        %vm1064 = vmor %vm940, %vm1032
        %v1065 = vsel %vm1033, 1.0, 0.0
        %v1066 = vsel %vm1034, 1.0, 0.0
        %v1067 = vsel %vm1035, 1.0, 0.0
        %v1068 = vsel %vm1036, 1.0, 0.0
        %v1069 = vsel %vm1037, 1.0, 0.0
        %v1070 = vsel %vm1038, 1.0, 0.0
        %v1071 = vsel %vm1039, 1.0, 0.0
        %v1072 = vsel %vm1040, 1.0, 0.0
        %v1073 = vsel %vm1041, 1.0, 0.0
        %v1074 = vsel %vm1042, 1.0, 0.0
        %v1075 = vsel %vm1043, 1.0, 0.0
        %v1076 = vsel %vm1044, 1.0, 0.0
        %v1077 = vsel %vm1045, 1.0, 0.0
        %v1078 = vsel %vm1046, 1.0, 0.0
        %v1079 = vsel %vm1047, 1.0, 0.0
        %v1080 = vsel %vm1048, 1.0, 0.0
        %v1081 = vsel %vm1049, 1.0, 0.0
        %v1082 = vsel %vm1050, 1.0, 0.0
        %v1083 = vsel %vm1051, 1.0, 0.0
        %v1084 = vsel %vm1052, 1.0, 0.0
        %v1085 = vsel %vm1053, 1.0, 0.0
        %v1086 = vsel %vm1054, 1.0, 0.0
        %v1087 = vsel %vm1055, 1.0, 0.0
        %v1088 = vsel %vm1056, 1.0, 0.0
        %v1089 = vsel %vm1057, 1.0, 0.0
        %v1090 = vsel %vm1058, 1.0, 0.0
        %v1091 = vsel %vm1059, 1.0, 0.0
        %v1092 = vsel %vm1060, 1.0, 0.0
        %v1093 = vsel %vm1061, 1.0, 0.0
        %v1094 = vsel %vm1062, 1.0, 0.0
        %v1095 = vsel %vm1063, 1.0, 0.0
        %v1096 = vsel %vm1064, 1.0, 0.0
        %vm1097 = vcmask 523520
        %v1098 = vsel %vm1097, %v1065, 0.0
        %v1099 = vsel %vm1097, %v1066, 0.0
        %v1100 = vadd.f32 %v1098, %v1099
        %v1101 = vsel %vm1097, %v1067, 0.0
        %v1102 = vadd.f32 %v1100, %v1101
        %v1103 = vsel %vm1097, %v1068, 0.0
        %v1104 = vadd.f32 %v1102, %v1103
        %v1105 = vrot.slane %v1104, 4
        %v1106 = vadd.f32 %v1104, %v1105
        %v1107 = vrot.slane %v1106, 2
        %v1108 = vadd.f32 %v1106, %v1107
        %v1109 = vrot.slane %v1108, 1
        %v1110 = vadd.f32 %v1108, %v1109
        %v1111 = vsel %vm1097, %v1069, 0.0
        %v1112 = vsel %vm1097, %v1070, 0.0
        %v1113 = vadd.f32 %v1111, %v1112
        %v1114 = vsel %vm1097, %v1071, 0.0
        %v1115 = vadd.f32 %v1113, %v1114
        %v1116 = vsel %vm1097, %v1072, 0.0
        %v1117 = vadd.f32 %v1115, %v1116
        %v1118 = vrot.slane %v1117, 4
        %v1119 = vadd.f32 %v1117, %v1118
        %v1120 = vrot.slane %v1119, 2
        %v1121 = vadd.f32 %v1119, %v1120
        %v1122 = vrot.slane %v1121, 1
        %v1123 = vadd.f32 %v1121, %v1122
        %v1124 = vsel %vm1097, %v1073, 0.0
        %v1125 = vsel %vm1097, %v1074, 0.0
        %v1126 = vadd.f32 %v1124, %v1125
        %v1127 = vsel %vm1097, %v1075, 0.0
        %v1128 = vadd.f32 %v1126, %v1127
        %v1129 = vsel %vm1097, %v1076, 0.0
        %v1130 = vadd.f32 %v1128, %v1129
        %v1131 = vrot.slane %v1130, 4
        %v1132 = vadd.f32 %v1130, %v1131
        %v1133 = vrot.slane %v1132, 2
        %v1134 = vadd.f32 %v1132, %v1133
        %v1135 = vrot.slane %v1134, 1
        %v1136 = vadd.f32 %v1134, %v1135
        %v1137 = vsel %vm1097, %v1077, 0.0
        %v1138 = vsel %vm1097, %v1078, 0.0
        %v1139 = vadd.f32 %v1137, %v1138
        %v1140 = vsel %vm1097, %v1079, 0.0
        %v1141 = vadd.f32 %v1139, %v1140
        %v1142 = vsel %vm1097, %v1080, 0.0
        %v1143 = vadd.f32 %v1141, %v1142
        %v1144 = vrot.slane %v1143, 4
        %v1145 = vadd.f32 %v1143, %v1144
        %v1146 = vrot.slane %v1145, 2
        %v1147 = vadd.f32 %v1145, %v1146
        %v1148 = vrot.slane %v1147, 1
        %v1149 = vadd.f32 %v1147, %v1148
        %v1150 = vsel %vm1097, %v1081, 0.0
        %v1151 = vsel %vm1097, %v1082, 0.0
        %v1152 = vadd.f32 %v1150, %v1151
        %v1153 = vsel %vm1097, %v1083, 0.0
        %v1154 = vadd.f32 %v1152, %v1153
        %v1155 = vsel %vm1097, %v1084, 0.0
        %v1156 = vadd.f32 %v1154, %v1155
        %v1157 = vrot.slane %v1156, 4
        %v1158 = vadd.f32 %v1156, %v1157
        %v1159 = vrot.slane %v1158, 2
        %v1160 = vadd.f32 %v1158, %v1159
        %v1161 = vrot.slane %v1160, 1
        %v1162 = vadd.f32 %v1160, %v1161
        %v1163 = vsel %vm1097, %v1085, 0.0
        %v1164 = vsel %vm1097, %v1086, 0.0
        %v1165 = vadd.f32 %v1163, %v1164
        %v1166 = vsel %vm1097, %v1087, 0.0
        %v1167 = vadd.f32 %v1165, %v1166
        %v1168 = vsel %vm1097, %v1088, 0.0
        %v1169 = vadd.f32 %v1167, %v1168
        %v1170 = vrot.slane %v1169, 4
        %v1171 = vadd.f32 %v1169, %v1170
        %v1172 = vrot.slane %v1171, 2
        %v1173 = vadd.f32 %v1171, %v1172
        %v1174 = vrot.slane %v1173, 1
        %v1175 = vadd.f32 %v1173, %v1174
        %v1176 = vsel %vm1097, %v1089, 0.0
        %v1177 = vsel %vm1097, %v1090, 0.0
        %v1178 = vadd.f32 %v1176, %v1177
        %v1179 = vsel %vm1097, %v1091, 0.0
        %v1180 = vadd.f32 %v1178, %v1179
        %v1181 = vsel %vm1097, %v1092, 0.0
        %v1182 = vadd.f32 %v1180, %v1181
        %v1183 = vrot.slane %v1182, 4
        %v1184 = vadd.f32 %v1182, %v1183
        %v1185 = vrot.slane %v1184, 2
        %v1186 = vadd.f32 %v1184, %v1185
        %v1187 = vrot.slane %v1186, 1
        %v1188 = vadd.f32 %v1186, %v1187
        %v1189 = vsel %vm1097, %v1093, 0.0
        %v1190 = vsel %vm1097, %v1094, 0.0
        %v1191 = vadd.f32 %v1189, %v1190
        %v1192 = vsel %vm1097, %v1095, 0.0
        %v1193 = vadd.f32 %v1191, %v1192
        %v1194 = vsel %vm1097, %v1096, 0.0
        %v1195 = vadd.f32 %v1193, %v1194
        %v1196 = vrot.slane %v1195, 4
        %v1197 = vadd.f32 %v1195, %v1196
        %v1198 = vrot.slane %v1197, 2
        %v1199 = vadd.f32 %v1197, %v1198
        %v1200 = vrot.slane %v1199, 1
        %v1201 = vadd.f32 %v1199, %v1200
        %v1202 = vcvt.f32.s32.to.zero.pseudo %v1110
        %v1203 = vcvt.f32.s32.to.zero.pseudo %v1123
        %v1204 = vcvt.f32.s32.to.zero.pseudo %v1136
        %v1205 = vcvt.f32.s32.to.zero.pseudo %v1149
        %v1206 = vcvt.f32.s32.to.zero.pseudo %v1162
        %v1207 = vcvt.f32.s32.to.zero.pseudo %v1175
        %v1208 = vcvt.f32.s32.to.zero.pseudo %v1188
        %v1209 = vcvt.f32.s32.to.zero.pseudo %v1201
        %s1211 = sor.u32 256, 32
        %1212 = vbcast.lane.b32.xlu0 %v1202, %s1211
        %v1213 = vpop.permute.xlu0 %1212
        %s1215 = sor.u32 256, 40
        %1216 = vbcast.lane.b32.xlu0 %v1202, %s1215
        %v1217 = vpop.permute.xlu0 %1216
        %s1219 = sor.u32 256, 48
        %1220 = vbcast.lane.b32.xlu0 %v1202, %s1219
        %v1221 = vpop.permute.xlu0 %1220
        %s1223 = sor.u32 256, 56
        %1224 = vbcast.lane.b32.xlu0 %v1202, %s1223
        %v1225 = vpop.permute.xlu0 %1224
        %s1227 = sor.u32 256, 32
        %1228 = vbcast.lane.b32.xlu0 %v1203, %s1227
        %v1229 = vpop.permute.xlu0 %1228
        %s1231 = sor.u32 256, 40
        %1232 = vbcast.lane.b32.xlu0 %v1203, %s1231
        %v1233 = vpop.permute.xlu0 %1232
        %s1235 = sor.u32 256, 48
        %1236 = vbcast.lane.b32.xlu0 %v1203, %s1235
        %v1237 = vpop.permute.xlu0 %1236
        %s1239 = sor.u32 256, 56
        %1240 = vbcast.lane.b32.xlu0 %v1203, %s1239
        %v1241 = vpop.permute.xlu0 %1240
        %s1243 = sor.u32 256, 32
        %1244 = vbcast.lane.b32.xlu0 %v1204, %s1243
        %v1245 = vpop.permute.xlu0 %1244
        %s1247 = sor.u32 256, 40
        %1248 = vbcast.lane.b32.xlu0 %v1204, %s1247
        %v1249 = vpop.permute.xlu0 %1248
        %s1251 = sor.u32 256, 48
        %1252 = vbcast.lane.b32.xlu0 %v1204, %s1251
        %v1253 = vpop.permute.xlu0 %1252
        %s1255 = sor.u32 256, 56
        %1256 = vbcast.lane.b32.xlu0 %v1204, %s1255
        %v1257 = vpop.permute.xlu0 %1256
        %s1259 = sor.u32 256, 32
        %1260 = vbcast.lane.b32.xlu0 %v1205, %s1259
        %v1261 = vpop.permute.xlu0 %1260
        %s1263 = sor.u32 256, 40
        %1264 = vbcast.lane.b32.xlu0 %v1205, %s1263
        %v1265 = vpop.permute.xlu0 %1264
        %s1267 = sor.u32 256, 48
        %1268 = vbcast.lane.b32.xlu0 %v1205, %s1267
        %v1269 = vpop.permute.xlu0 %1268
        %s1271 = sor.u32 256, 56
        %1272 = vbcast.lane.b32.xlu0 %v1205, %s1271
        %v1273 = vpop.permute.xlu0 %1272
        %s1275 = sor.u32 256, 32
        %1276 = vbcast.lane.b32.xlu0 %v1206, %s1275
        %v1277 = vpop.permute.xlu0 %1276
        %s1279 = sor.u32 256, 40
        %1280 = vbcast.lane.b32.xlu0 %v1206, %s1279
        %v1281 = vpop.permute.xlu0 %1280
        %s1283 = sor.u32 256, 48
        %1284 = vbcast.lane.b32.xlu0 %v1206, %s1283
        %v1285 = vpop.permute.xlu0 %1284
        %s1287 = sor.u32 256, 56
        %1288 = vbcast.lane.b32.xlu0 %v1206, %s1287
        %v1289 = vpop.permute.xlu0 %1288
        %s1291 = sor.u32 256, 32
        %1292 = vbcast.lane.b32.xlu0 %v1207, %s1291
        %v1293 = vpop.permute.xlu0 %1292
        %s1295 = sor.u32 256, 40
        %1296 = vbcast.lane.b32.xlu0 %v1207, %s1295
        %v1297 = vpop.permute.xlu0 %1296
        %s1299 = sor.u32 256, 48
        %1300 = vbcast.lane.b32.xlu0 %v1207, %s1299
        %v1301 = vpop.permute.xlu0 %1300
        %s1303 = sor.u32 256, 56
        %1304 = vbcast.lane.b32.xlu0 %v1207, %s1303
        %v1305 = vpop.permute.xlu0 %1304
        %s1307 = sor.u32 256, 32
        %1308 = vbcast.lane.b32.xlu0 %v1208, %s1307
        %v1309 = vpop.permute.xlu0 %1308
        %s1311 = sor.u32 256, 40
        %1312 = vbcast.lane.b32.xlu0 %v1208, %s1311
        %v1313 = vpop.permute.xlu0 %1312
        %s1315 = sor.u32 256, 48
        %1316 = vbcast.lane.b32.xlu0 %v1208, %s1315
        %v1317 = vpop.permute.xlu0 %1316
        %s1319 = sor.u32 256, 56
        %1320 = vbcast.lane.b32.xlu0 %v1208, %s1319
        %v1321 = vpop.permute.xlu0 %1320
        %s1323 = sor.u32 256, 32
        %1324 = vbcast.lane.b32.xlu0 %v1209, %s1323
        %v1325 = vpop.permute.xlu0 %1324
        %s1327 = sor.u32 256, 40
        %1328 = vbcast.lane.b32.xlu0 %v1209, %s1327
        %v1329 = vpop.permute.xlu0 %1328
        %s1331 = sor.u32 256, 48
        %1332 = vbcast.lane.b32.xlu0 %v1209, %s1331
        %v1333 = vpop.permute.xlu0 %1332
        %s1335 = sor.u32 256, 56
        %1336 = vbcast.lane.b32.xlu0 %v1209, %s1335
        %v1337 = vpop.permute.xlu0 %1336
        %vm1338 = vcmp.eq.s32.totalorder %v1213, %v658
        %vm1339 = vcmp.eq.s32.totalorder %v1217, %v658
        %vm1340 = vcmp.eq.s32.totalorder %v1221, %v658
        %vm1341 = vcmp.eq.s32.totalorder %v1225, %v658
        %vm1342 = vcmp.eq.s32.totalorder %v1229, %v658
        %vm1343 = vcmp.eq.s32.totalorder %v1233, %v658
        %vm1344 = vcmp.eq.s32.totalorder %v1237, %v658
        %vm1345 = vcmp.eq.s32.totalorder %v1241, %v658
        %vm1346 = vcmp.eq.s32.totalorder %v1245, %v658
        %vm1347 = vcmp.eq.s32.totalorder %v1249, %v658
        %vm1348 = vcmp.eq.s32.totalorder %v1253, %v658
        %vm1349 = vcmp.eq.s32.totalorder %v1257, %v658
        %vm1350 = vcmp.eq.s32.totalorder %v1261, %v658
        %vm1351 = vcmp.eq.s32.totalorder %v1265, %v658
        %vm1352 = vcmp.eq.s32.totalorder %v1269, %v658
        %vm1353 = vcmp.eq.s32.totalorder %v1273, %v658
        %vm1354 = vcmp.eq.s32.totalorder %v1277, %v658
        %vm1355 = vcmp.eq.s32.totalorder %v1281, %v658
        %vm1356 = vcmp.eq.s32.totalorder %v1285, %v658
        %vm1357 = vcmp.eq.s32.totalorder %v1289, %v658
        %vm1358 = vcmp.eq.s32.totalorder %v1293, %v658
        %vm1359 = vcmp.eq.s32.totalorder %v1297, %v658
        %vm1360 = vcmp.eq.s32.totalorder %v1301, %v658
        %vm1361 = vcmp.eq.s32.totalorder %v1305, %v658
        %vm1362 = vcmp.eq.s32.totalorder %v1309, %v658
        %vm1363 = vcmp.eq.s32.totalorder %v1313, %v658
        %vm1364 = vcmp.eq.s32.totalorder %v1317, %v658
        %vm1365 = vcmp.eq.s32.totalorder %v1321, %v658
        %vm1366 = vcmp.eq.s32.totalorder %v1325, %v658
        %vm1367 = vcmp.eq.s32.totalorder %v1329, %v658
        %vm1368 = vcmp.eq.s32.totalorder %v1333, %v658
        %vm1369 = vcmp.eq.s32.totalorder %v1337, %v658
        %v1370 = vsel %vm1338, %v666, 0.0
        %v1371 = vsel %vm1339, %v670, 0.0
        %v1372 = vsel %vm1340, %v674, 0.0
        %v1373 = vsel %vm1341, %v678, 0.0
        %v1374 = vsel %vm1342, %v686, 0.0
        %v1375 = vsel %vm1343, %v690, 0.0
        %v1376 = vsel %vm1344, %v694, 0.0
        %v1377 = vsel %vm1345, %v698, 0.0
        %v1378 = vsel %vm1346, %v706, 0.0
        %v1379 = vsel %vm1347, %v710, 0.0
        %v1380 = vsel %vm1348, %v714, 0.0
        %v1381 = vsel %vm1349, %v718, 0.0
        %v1382 = vsel %vm1350, %v726, 0.0
        %v1383 = vsel %vm1351, %v730, 0.0
        %v1384 = vsel %vm1352, %v734, 0.0
        %v1385 = vsel %vm1353, %v738, 0.0
        %v1386 = vsel %vm1354, %v746, 0.0
        %v1387 = vsel %vm1355, %v750, 0.0
        %v1388 = vsel %vm1356, %v754, 0.0
        %v1389 = vsel %vm1357, %v758, 0.0
        %v1390 = vsel %vm1358, %v766, 0.0
        %v1391 = vsel %vm1359, %v770, 0.0
        %v1392 = vsel %vm1360, %v774, 0.0
        %v1393 = vsel %vm1361, %v778, 0.0
        %v1394 = vsel %vm1362, %v786, 0.0
        %v1395 = vsel %vm1363, %v790, 0.0
        %v1396 = vsel %vm1364, %v794, 0.0
        %v1397 = vsel %vm1365, %v798, 0.0
        %v1398 = vsel %vm1366, %v806, 0.0
        %v1399 = vsel %vm1367, %v810, 0.0
        %v1400 = vsel %vm1368, %v814, 0.0
        %v1401 = vsel %vm1369, %v818, 0.0
        %v1402 = vsel %vm521, %v1370, 0.0
        %v1403 = vsel %vm521, %v1371, 0.0
        %v1404 = vadd.f32 %v1402, %v1403
        %v1405 = vsel %vm521, %v1372, 0.0
        %v1406 = vadd.f32 %v1404, %v1405
        %v1407 = vsel %vm521, %v1373, 0.0
        %v1408 = vadd.f32 %v1406, %v1407
        %v1409 = vrot.slane %v1408, 4
        %v1410 = vadd.f32 %v1408, %v1409
        %v1411 = vrot.slane %v1410, 2
        %v1412 = vadd.f32 %v1410, %v1411
        %v1413 = vrot.slane %v1412, 1
        %v1414 = vadd.f32 %v1412, %v1413
        %v1415 = vsel %vm521, %v1374, 0.0
        %v1416 = vsel %vm521, %v1375, 0.0
        %v1417 = vadd.f32 %v1415, %v1416
        %v1418 = vsel %vm521, %v1376, 0.0
        %v1419 = vadd.f32 %v1417, %v1418
        %v1420 = vsel %vm521, %v1377, 0.0
        %v1421 = vadd.f32 %v1419, %v1420
        %v1422 = vrot.slane %v1421, 4
        %v1423 = vadd.f32 %v1421, %v1422
        %v1424 = vrot.slane %v1423, 2
        %v1425 = vadd.f32 %v1423, %v1424
        %v1426 = vrot.slane %v1425, 1
        %v1427 = vadd.f32 %v1425, %v1426
        %v1428 = vsel %vm521, %v1378, 0.0
        %v1429 = vsel %vm521, %v1379, 0.0
        %v1430 = vadd.f32 %v1428, %v1429
        %v1431 = vsel %vm521, %v1380, 0.0
        %v1432 = vadd.f32 %v1430, %v1431
        %v1433 = vsel %vm521, %v1381, 0.0
        %v1434 = vadd.f32 %v1432, %v1433
        %v1435 = vrot.slane %v1434, 4
        %v1436 = vadd.f32 %v1434, %v1435
        %v1437 = vrot.slane %v1436, 2
        %v1438 = vadd.f32 %v1436, %v1437
        %v1439 = vrot.slane %v1438, 1
        %v1440 = vadd.f32 %v1438, %v1439
        %v1441 = vsel %vm521, %v1382, 0.0
        %v1442 = vsel %vm521, %v1383, 0.0
        %v1443 = vadd.f32 %v1441, %v1442
        %v1444 = vsel %vm521, %v1384, 0.0
        %v1445 = vadd.f32 %v1443, %v1444
        %v1446 = vsel %vm521, %v1385, 0.0
        %v1447 = vadd.f32 %v1445, %v1446
        %v1448 = vrot.slane %v1447, 4
        %v1449 = vadd.f32 %v1447, %v1448
        %v1450 = vrot.slane %v1449, 2
        %v1451 = vadd.f32 %v1449, %v1450
        %v1452 = vrot.slane %v1451, 1
        %v1453 = vadd.f32 %v1451, %v1452
        %v1454 = vsel %vm521, %v1386, 0.0
        %v1455 = vsel %vm521, %v1387, 0.0
        %v1456 = vadd.f32 %v1454, %v1455
        %v1457 = vsel %vm521, %v1388, 0.0
        %v1458 = vadd.f32 %v1456, %v1457
        %v1459 = vsel %vm521, %v1389, 0.0
        %v1460 = vadd.f32 %v1458, %v1459
        %v1461 = vrot.slane %v1460, 4
        %v1462 = vadd.f32 %v1460, %v1461
        %v1463 = vrot.slane %v1462, 2
        %v1464 = vadd.f32 %v1462, %v1463
        %v1465 = vrot.slane %v1464, 1
        %v1466 = vadd.f32 %v1464, %v1465
        %v1467 = vsel %vm521, %v1390, 0.0
        %v1468 = vsel %vm521, %v1391, 0.0
        %v1469 = vadd.f32 %v1467, %v1468
        %v1470 = vsel %vm521, %v1392, 0.0
        %v1471 = vadd.f32 %v1469, %v1470
        %v1472 = vsel %vm521, %v1393, 0.0
        %v1473 = vadd.f32 %v1471, %v1472
        %v1474 = vrot.slane %v1473, 4
        %v1475 = vadd.f32 %v1473, %v1474
        %v1476 = vrot.slane %v1475, 2
        %v1477 = vadd.f32 %v1475, %v1476
        %v1478 = vrot.slane %v1477, 1
        %v1479 = vadd.f32 %v1477, %v1478
        %v1480 = vsel %vm521, %v1394, 0.0
        %v1481 = vsel %vm521, %v1395, 0.0
        %v1482 = vadd.f32 %v1480, %v1481
        %v1483 = vsel %vm521, %v1396, 0.0
        %v1484 = vadd.f32 %v1482, %v1483
        %v1485 = vsel %vm521, %v1397, 0.0
        %v1486 = vadd.f32 %v1484, %v1485
        %v1487 = vrot.slane %v1486, 4
        %v1488 = vadd.f32 %v1486, %v1487
        %v1489 = vrot.slane %v1488, 2
        %v1490 = vadd.f32 %v1488, %v1489
        %v1491 = vrot.slane %v1490, 1
        %v1492 = vadd.f32 %v1490, %v1491
        %v1493 = vsel %vm521, %v1398, 0.0
        %v1494 = vsel %vm521, %v1399, 0.0
        %v1495 = vadd.f32 %v1493, %v1494
        %v1496 = vsel %vm521, %v1400, 0.0
        %v1497 = vadd.f32 %v1495, %v1496
        %v1498 = vsel %vm521, %v1401, 0.0
        %v1499 = vadd.f32 %v1497, %v1498
        %v1500 = vrot.slane %v1499, 4
        %v1501 = vadd.f32 %v1499, %v1500
        %v1502 = vrot.slane %v1501, 2
        %v1503 = vadd.f32 %v1501, %v1502
        %v1504 = vrot.slane %v1503, 1
        %v1505 = vadd.f32 %v1503, %v1504
        %v1506 = vld [vmem:[%s7] sm:$0xff]
        %v1507 = vld [vmem:[%s7 + $0x8] sm:$0xff]
        %v1508 = vld [vmem:[%s7 + $0x10] sm:$0xff]
        %v1509 = vld [vmem:[%s7 + $0x18] sm:$0xff]
        %v1510 = vld [vmem:[%s8] sm:$0xff]
        %v1511 = vld [vmem:[%s8 + $0x8] sm:$0xff]
        %v1512 = vld [vmem:[%s8 + $0x10] sm:$0xff]
        %v1513 = vld [vmem:[%s8 + $0x18] sm:$0xff]
        %vm1522 = vcmask 1041409
        %v1523 = vsel %vm1522, %v1427, %v1414
        %vm1524 = vcmask 1042434
        %v1525 = vsel %vm1524, %v1440, %v1523
        %vm1526 = vcmask 1043459
        %v1527 = vsel %vm1526, %v1453, %v1525
        %vm1528 = vcmask 1044484
        %v1529 = vsel %vm1528, %v1466, %v1527
        %vm1530 = vcmask 1045509
        %v1531 = vsel %vm1530, %v1479, %v1529
        %vm1532 = vcmask 1046534
        %v1533 = vsel %vm1532, %v1492, %v1531
        %vm1534 = vcmask 1047559
        %v1535 = vsel %vm1534, %v1505, %v1533
        %v1536 = vsel %vm521, %v1535, 0
        %1538 = vmatprep.subr.mxu0 0.0
        %1539 = vmatpush1.msra.mxu0 %v1510
        %1540 = vmatprep.subr.mxu0 0.0
        %1541 = vmatpush1.msra.mxu0 %v1511
        %1542 = vmatprep.subr.mxu0 0.0
        %1543 = vmatpush1.msra.mxu0 %v1512
        %1544 = vmatprep.subr.mxu0 0.0
        %1545 = vmatpush1.msra.mxu0 %v1513
        %1546 = vmatprep.subr.mxu0 0.0
        %1547 = vmatpush1.msra.mxu0 0.0
        %1548 = vmatprep.subr.mxu0 0.0
        %1549 = vmatpush1.msra.mxu0 0.0
        %1550 = vmatprep.subr.mxu0 0.0
        %1551 = vmatpush1.msra.mxu0 0.0
        %1552 = vmatprep.subr.mxu0 0.0
        %1553 = vmatpush1.msra.mxu0 0.0
        %1554 = vmatprep.subr.mxu0 0.0
        %1555 = vmatpush1.msra.mxu0 0.0
        %1556 = vmatprep.subr.mxu0 0.0
        %1557 = vmatpush1.msra.mxu0 0.0
        %1558 = vmatprep.subr.mxu0 0.0
        %1559 = vmatpush1.msra.mxu0 0.0
        %1560 = vmatprep.subr.mxu0 0.0
        %1561 = vmatpush1.msra.mxu0 0.0
        %1562 = vmatprep.subr.mxu0 0.0
        %1563 = vmatpush1.msra.mxu0 0.0
        %1564 = vmatprep.subr.mxu0 0.0
        %1565 = vmatpush1.msra.mxu0 0.0
        %1566 = vmatprep.subr.mxu0 0.0
        %1567 = vmatpush1.msra.mxu0 0.0
        %1568 = vmatprep.subr.mxu0 0.0
        %1569 = vmatpush1.msra.mxu0 0.0
        %1570 = vmatprep.subr.mxu0 0.0
        %1571 = vmatpush1.msra.mxu0 0.0
        %1572 = vmatprep.subr.mxu0 0.0
        %1573 = vmatpush1.msra.mxu0 0.0
        %1574 = vmatprep.subr.mxu0 0.0
        %1575 = vmatpush1.msra.mxu0 0.0
        %1576 = vmatprep.subr.mxu0 0.0
        %1577 = vmatpush1.msra.mxu0 0.0
        %1578 = vmatprep.subr.mxu0 0.0
        %1579 = vmatpush1.msra.mxu0 0.0
        %1580 = vmatprep.subr.mxu0 0.0
        %1581 = vmatpush1.msra.mxu0 0.0
        %1582 = vmatprep.subr.mxu0 0.0
        %1583 = vmatpush1.msra.mxu0 0.0
        %1584 = vmatprep.subr.mxu0 0.0
        %1585 = vmatpush1.msra.mxu0 0.0
        %1586 = vmatprep.subr.mxu0 0.0
        %1587 = vmatpush1.msra.mxu0 0.0
        %1588 = vmatprep.subr.mxu0 0.0
        %1589 = vmatpush1.msra.mxu0 0.0
        %1590 = vmatprep.subr.mxu0 0.0
        %1591 = vmatpush1.msra.mxu0 0.0
        %1592 = vmatprep.subr.mxu0 0.0
        %1593 = vmatpush1.msra.mxu0 0.0
        %1594 = vmatprep.subr.mxu0 0.0
        %1595 = vmatpush1.msra.mxu0 0.0
        %1596 = vmatprep.subr.mxu0 0.0
        %1597 = vmatpush1.msra.mxu0 0.0
        %1598 = vmatprep.subr.mxu0 0.0
        %1599 = vmatpush1.msra.mxu0 0.0
        %1600 = vmatprep.subr.mxu0 0.0
        %1601 = vmatpush1.msra.mxu0 0.0
        %1602 = vmatprep.mubr.f32.mxu0 0.0
        %1603 = vmatmul.mubr.f32.gmra.mrb[0].mxu0 %v1536
        %v1604 = vpop.f32.mrb[0].mxu0
        %v1605 = vadd.f32 0.0, %v1604
        %v1606 = vpop.f32.mrb[0].mxu0
        %1607 = vdwg.mxu0
        %1608 = vrot.lane.b32.xlu0 %v651, 96
        %v1609 = vpop.permute.xlu0 %1608
        %v1610 = vsel %vm521, %v1609, 0
        %1612 = vmatprep.subr.mxu0 0.0
        %1613 = vmatpush1.msra.mxu0 %v1506
        %1614 = vmatprep.subr.mxu0 0.0
        %1615 = vmatpush1.msra.mxu0 %v1507
        %1616 = vmatprep.subr.mxu0 0.0
        %1617 = vmatpush1.msra.mxu0 %v1508
        %1618 = vmatprep.subr.mxu0 0.0
        %1619 = vmatpush1.msra.mxu0 %v1509
        %1620 = vmatprep.subr.mxu0 0.0
        %1621 = vmatpush1.msra.mxu0 0.0
        %1622 = vmatprep.subr.mxu0 0.0
        %1623 = vmatpush1.msra.mxu0 0.0
        %1624 = vmatprep.subr.mxu0 0.0
        %1625 = vmatpush1.msra.mxu0 0.0
        %1626 = vmatprep.subr.mxu0 0.0
        %1627 = vmatpush1.msra.mxu0 0.0
        %1628 = vmatprep.subr.mxu0 0.0
        %1629 = vmatpush1.msra.mxu0 0.0
        %1630 = vmatprep.subr.mxu0 0.0
        %1631 = vmatpush1.msra.mxu0 0.0
        %1632 = vmatprep.subr.mxu0 0.0
        %1633 = vmatpush1.msra.mxu0 0.0
        %1634 = vmatprep.subr.mxu0 0.0
        %1635 = vmatpush1.msra.mxu0 0.0
        %1636 = vmatprep.subr.mxu0 0.0
        %1637 = vmatpush1.msra.mxu0 0.0
        %1638 = vmatprep.subr.mxu0 0.0
        %1639 = vmatpush1.msra.mxu0 0.0
        %1640 = vmatprep.subr.mxu0 0.0
        %1641 = vmatpush1.msra.mxu0 0.0
        %1642 = vmatprep.subr.mxu0 0.0
        %1643 = vmatpush1.msra.mxu0 0.0
        %1644 = vmatprep.subr.mxu0 0.0
        %1645 = vmatpush1.msra.mxu0 0.0
        %1646 = vmatprep.subr.mxu0 0.0
        %1647 = vmatpush1.msra.mxu0 0.0
        %1648 = vmatprep.subr.mxu0 0.0
        %1649 = vmatpush1.msra.mxu0 0.0
        %1650 = vmatprep.subr.mxu0 0.0
        %1651 = vmatpush1.msra.mxu0 0.0
        %1652 = vmatprep.subr.mxu0 0.0
        %1653 = vmatpush1.msra.mxu0 0.0
        %1654 = vmatprep.subr.mxu0 0.0
        %1655 = vmatpush1.msra.mxu0 0.0
        %1656 = vmatprep.subr.mxu0 0.0
        %1657 = vmatpush1.msra.mxu0 0.0
        %1658 = vmatprep.subr.mxu0 0.0
        %1659 = vmatpush1.msra.mxu0 0.0
        %1660 = vmatprep.subr.mxu0 0.0
        %1661 = vmatpush1.msra.mxu0 0.0
        %1662 = vmatprep.subr.mxu0 0.0
        %1663 = vmatpush1.msra.mxu0 0.0
        %1664 = vmatprep.subr.mxu0 0.0
        %1665 = vmatpush1.msra.mxu0 0.0
        %1666 = vmatprep.subr.mxu0 0.0
        %1667 = vmatpush1.msra.mxu0 0.0
        %1668 = vmatprep.subr.mxu0 0.0
        %1669 = vmatpush1.msra.mxu0 0.0
        %1670 = vmatprep.subr.mxu0 0.0
        %1671 = vmatpush1.msra.mxu0 0.0
        %1672 = vmatprep.subr.mxu0 0.0
        %1673 = vmatpush1.msra.mxu0 0.0
        %1674 = vmatprep.subr.mxu0 0.0
        %1675 = vmatpush1.msra.mxu0 0.0
        %1676 = vmatprep.mubr.f32.mxu0 0.0
        %1677 = vmatmul.mubr.f32.gmra.mrb[0].mxu0 %v1610
        %v1678 = vpop.f32.mrb[0].mxu0
        %v1679 = vadd.f32 %v1605, %v1678
        %v1680 = vpop.f32.mrb[0].mxu0
        %1681 = vdwg.mxu0
        %v1682 = vmax.f32 %v1679, 0.0
        %v1683 = vld [vmem:[%s9] sm:$0xff]
        %v1684 = vld [vmem:[%s9 + $0x8] sm:$0xff]
        %v1685 = vld [vmem:[%s9 + $0x10] sm:$0xff]
        %v1686 = vld [vmem:[%s9 + $0x18] sm:$0xff]
        %v1687 = vld [vmem:[%s9 + $0x20] sm:$0xff]
        %v1688 = vld [vmem:[%s9 + $0x28] sm:$0xff]
        %v1689 = vld [vmem:[%s9 + $0x30] sm:$0xff]
        %v1690 = vld [vmem:[%s9 + $0x38] sm:$0xff]
        %vm1691 = vcmask 523264
        %v1693 = vsel %vm1691, %v1682, 0
        %1695 = vmatprep.subr.mxu0 0.0
        %1696 = vmatpush1.msra.mxu0 %v1683
        %1697 = vmatprep.subr.mxu0 0.0
        %1698 = vmatpush1.msra.mxu0 %v1684
        %1699 = vmatprep.subr.mxu0 0.0
        %1700 = vmatpush1.msra.mxu0 %v1685
        %1701 = vmatprep.subr.mxu0 0.0
        %1702 = vmatpush1.msra.mxu0 %v1686
        %1703 = vmatprep.subr.mxu0 0.0
        %1704 = vmatpush1.msra.mxu0 %v1687
        %1705 = vmatprep.subr.mxu0 0.0
        %1706 = vmatpush1.msra.mxu0 %v1688
        %1707 = vmatprep.subr.mxu0 0.0
        %1708 = vmatpush1.msra.mxu0 %v1689
        %1709 = vmatprep.subr.mxu0 0.0
        %1710 = vmatpush1.msra.mxu0 %v1690
        %1711 = vmatprep.subr.mxu0 0.0
        %1712 = vmatpush1.msra.mxu0 0.0
        %1713 = vmatprep.subr.mxu0 0.0
        %1714 = vmatpush1.msra.mxu0 0.0
        %1715 = vmatprep.subr.mxu0 0.0
        %1716 = vmatpush1.msra.mxu0 0.0
        %1717 = vmatprep.subr.mxu0 0.0
        %1718 = vmatpush1.msra.mxu0 0.0
        %1719 = vmatprep.subr.mxu0 0.0
        %1720 = vmatpush1.msra.mxu0 0.0
        %1721 = vmatprep.subr.mxu0 0.0
        %1722 = vmatpush1.msra.mxu0 0.0
        %1723 = vmatprep.subr.mxu0 0.0
        %1724 = vmatpush1.msra.mxu0 0.0
        %1725 = vmatprep.subr.mxu0 0.0
        %1726 = vmatpush1.msra.mxu0 0.0
        %1727 = vmatprep.subr.mxu0 0.0
        %1728 = vmatpush1.msra.mxu0 0.0
        %1729 = vmatprep.subr.mxu0 0.0
        %1730 = vmatpush1.msra.mxu0 0.0
        %1731 = vmatprep.subr.mxu0 0.0
        %1732 = vmatpush1.msra.mxu0 0.0
        %1733 = vmatprep.subr.mxu0 0.0
        %1734 = vmatpush1.msra.mxu0 0.0
        %1735 = vmatprep.subr.mxu0 0.0
        %1736 = vmatpush1.msra.mxu0 0.0
        %1737 = vmatprep.subr.mxu0 0.0
        %1738 = vmatpush1.msra.mxu0 0.0
        %1739 = vmatprep.subr.mxu0 0.0
        %1740 = vmatpush1.msra.mxu0 0.0
        %1741 = vmatprep.subr.mxu0 0.0
        %1742 = vmatpush1.msra.mxu0 0.0
        %1743 = vmatprep.subr.mxu0 0.0
        %1744 = vmatpush1.msra.mxu0 0.0
        %1745 = vmatprep.subr.mxu0 0.0
        %1746 = vmatpush1.msra.mxu0 0.0
        %1747 = vmatprep.subr.mxu0 0.0
        %1748 = vmatpush1.msra.mxu0 0.0
        %1749 = vmatprep.subr.mxu0 0.0
        %1750 = vmatpush1.msra.mxu0 0.0
        %1751 = vmatprep.subr.mxu0 0.0
        %1752 = vmatpush1.msra.mxu0 0.0
        %1753 = vmatprep.subr.mxu0 0.0
        %1754 = vmatpush1.msra.mxu0 0.0
        %1755 = vmatprep.subr.mxu0 0.0
        %1756 = vmatpush1.msra.mxu0 0.0
        %1757 = vmatprep.subr.mxu0 0.0
        %1758 = vmatpush1.msra.mxu0 0.0
        %1759 = vmatprep.mubr.f32.mxu0 0.0
        %1760 = vmatmul.mubr.f32.gmra.mrb[0].mxu0 %v1693
        %v1761 = vpop.f32.mrb[0].mxu0
        %v1762 = vadd.f32 0.0, %v1761
        %v1763 = vpop.f32.mrb[0].mxu0
        %1764 = vdwg.mxu0
        %v1765 = vxor.u32 %v1762, 2147483648
        %v1766 = vmul.f32 %v1765, 1.442695
        %v1767 = vpow.pop %v1766
        %v1768 = vadd.f32 %v1767, 1.0
        %v1769 = vrcp.pop %v1768
        %v1770 = vmul.f32 1.0, %v1769
        %1772 = vrot.lane.b32.xlu0 %v1770, 32
        %v1773 = vpop.permute.xlu0 %1772
        %v1775 = vmul.f32 %v651, %v1773
        %1777 = vrot.lane.b32.xlu0 %v1775, 96
        %v1778 = vpop.permute.xlu0 %1777
        %1780 = vst.msk [vmem:[%s438] sm:$0xff] %vm521, %v1778
        %s1781 = sand.u32 %s259, 1
        %s1782 = scalar_lea.sflag [#allocation4], %s1781
        %s1783 = sand.u32 %s259, 1
        %s1784 = smul.addr %s1783, 8
        %s1785 = scalar_lea.vmem [#allocation10], %s1784
        // Predicated region
        $region77: #{tpu_custom_call.1} parent=59 // pred_check
          %p1786 = pneg %p269
        $region78: #{tpu_custom_call.1} parent=59 // pred_check_branch
          %1788 = sbr.rel (%p1786) target = $region80
        $region79: #{tpu_custom_call.1} parent=59 // pred_region
          %s1790 = ssub.s32 128, 128
          %1791 = vsyncadd %s1782, %s1790
          %s1792 = smul.addr %s31, 128
          %s1793 = scalar_lea.hbm %s10, %s1792
          %s1795 = sshll.u32 %s1785, 4
          %s1796 = int_to_ptr.vmem [resolvable:$true] %s1795
          %1798 = dma.vmem_to_hbm [thread:$0]  %s1796, 128, %s1793, %s1782
        $region80: #{tpu_custom_call.1} parent=59 // pred_fallthru
          _
      $region60: #{tpu_custom_call.1} parent=5 // pred_fallthru
        _
      %p1799 = scmp.le.s32.totalorder 2, %s26
      // Predicated region
      $region81: #{tpu_custom_call.1} parent=5 // pred_check
        %p1800 = pneg %p1799
      $region82: #{tpu_custom_call.1} parent=5 // pred_check_branch
        %1802 = sbr.rel (%p1800) target = $region84
      $region83: #{tpu_custom_call.1} parent=5 // pred_region
        %s1803 = ssub.s32 %s26, 2
        // Predicated region
        $region85: #{tpu_custom_call.1} parent=83 // pred_check
          %p1804 = pneg %p275
        $region86: #{tpu_custom_call.1} parent=83 // pred_check_branch
          %1806 = sbr.rel (%p1804) target = $region88
        $region87: #{tpu_custom_call.1} parent=83 // pred_region
          %s1807 = sand.u32 %s260, 1
          %s1808 = scalar_lea.sflag [#allocation4], %s1807
          %s1809 = sand.u32 %s260, 1
          %s1810 = smul.addr %s1809, 8
          %s1811 = scalar_lea.vmem [#allocation10], %s1810
          %1812 = dma.done %s1808, 128
        $region88: #{tpu_custom_call.1} parent=83 // pred_fallthru
          _
      $region84: #{tpu_custom_call.1} parent=5 // pred_fallthru
        _
    $region6: #{tpu_custom_call.1} parent=1 // loop_footer
      %s30 = sadd.s32 1, %s26
    $region7: #{tpu_custom_call.1} parent=1 // loop_footer_branch
      %25 = sbr.rel target = $region3
    $region8: #{tpu_custom_call.1} parent=1 // loop_exit
      _
    %1813 = vsyncpa [#allocation3], 1
    %s1814 = scalar_lea.sflag [#allocation3], 1
    %1815 = vsyncpa %s1814, 1
    %1816 = vsyncpa [#allocation6], 1
    %s1817 = scalar_lea.sflag [#allocation6], 1
    %1818 = vsyncpa %s1817, 1
    %1819 = vsyncpa [#allocation9], 1
    %1820 = vsyncpa [#allocation4], 1
    %s1821 = scalar_lea.sflag [#allocation4], 1
    %1822 = vsyncpa %s1821, 1

</llo_original>
